<compile_context>
chip_gen: v7x
topology: tpu7x:2x2x1
jax: 0.10.0
libtpu: 0.0.40
codegen_flags: <defaults>
</compile_context>

<pallas_src>
import functools
import math

import jax
import jax.numpy as jnp
from jax import lax
from jax.experimental import pallas as pl
from jax.experimental.pallas import tpu as pltpu


def _layer_norm(x, w, eps=1e-5):
    # matches F.layer_norm(x.float(), [dim]) * weight (no bias, biased variance)
    x = x.astype(jnp.float32)
    mu = jnp.mean(x, axis=-1, keepdims=True)
    var = jnp.mean((x - mu) ** 2, axis=-1, keepdims=True)
    return (x - mu) * lax.rsqrt(var + eps) * w


def _modulate(x, shift, scale):
    return x * (1.0 + scale) + shift


def _apply_rotary(t, cos, sin, first_half, head_dim):
    """Rotate-half rotary on a packed (rows, H*head_dim) tile.

    rot(t) = [-t2, t1] per head is built from two full-width lane rotations
    (XLU slot) + a per-lane select, so no slice/concatenate relayout sits on
    the VPU critical path.  pltpu.roll follows jnp.roll semantics:
    out[..., i] = t[..., i - shift].
    """
    d = t.shape[-1]
    half = head_dim // 2
    t_plus = pltpu.roll(t, half, axis=1)        # out[..., i] = t[..., i - half]
    t_minus = pltpu.roll(t, d - half, axis=1)   # out[..., i] = t[..., i + half]
    rot = jnp.where(first_half, -t_minus, t_plus)
    return t * cos + rot * sin


# --------------------------- pass 1: adaLN + QKV ---------------------------
def ddit_qkv_kernel(c_ref, x_ref, cos_ref, sin_ref,
                    wada_ref, bada_ref, n1w_ref, wqkv_ref,
                    mods_ref, q_ref, kT_ref, v_ref,
                    *, n_heads, dim, head_dim):
    s_idx = pl.program_id(1)

    # adaLN modulation: once per batch element, in f32.  The mods output block
    # index is constant along the seq axis, so it stays resident and is read
    # back on every subsequent seq tile of this batch element.
    @pl.when(s_idx == 0)
    def _():
        cvec = c_ref[0].astype(jnp.float32)                        # (1, cond)
        mods_ref[0] = (jnp.dot(cvec, wada_ref[...],
                               preferred_element_type=jnp.float32)
                       + bada_ref[...])                            # (1, 6D)

    mods = mods_ref[0]
    shift_msa = mods[:, 0:dim]
    scale_msa = mods[:, dim:2 * dim]

    x_t = x_ref[0].astype(jnp.float32)                             # (ts, D)
    xm = _modulate(_layer_norm(x_t, n1w_ref[...]), shift_msa, scale_msa)
    qkv = jnp.dot(xm.astype(jnp.bfloat16), wqkv_ref[...],
                  preferred_element_type=jnp.float32)              # (ts, 3D) f32

    cos = cos_ref[...]
    sin = sin_ref[...]
    lane = lax.broadcasted_iota(jnp.int32, (x_t.shape[0], dim), 1)
    first_half = (lane % head_dim) < (head_dim // 2)

    q = _apply_rotary(qkv[:, 0:dim], cos, sin, first_half, head_dim)
    k = _apply_rotary(qkv[:, dim:2 * dim], cos, sin, first_half, head_dim)
    v = qkv[:, 2 * dim:3 * dim]
    kt = k.T                                                       # (D, ts) f32

    for h in range(n_heads):                                       # static, small
        lo = h * head_dim
        hi = lo + head_dim
        q_ref[h] = q[:, lo:hi].astype(jnp.bfloat16)                # (ts, hd)
        kT_ref[h] = kt[lo:hi, :].astype(jnp.bfloat16)              # (hd, ts)
        v_ref[h] = v[:, lo:hi].astype(jnp.bfloat16)                # (ts, hd)


# ---------------------- pass 2: attention + out-proj + MLP ------------------
def ddit_attn_mlp_kernel(mods_ref, x_ref, q_ref, kT_ref, v_ref,
                         wout_ref, n2w_ref, w1_ref, b1_ref, w2_ref, b2_ref,
                         o_ref, acc_sc, *, n_heads, dim, head_dim):
    mods = mods_ref[0]                                             # (1, 6D)
    gate_msa = mods[:, 2 * dim:3 * dim]
    shift_mlp = mods[:, 3 * dim:4 * dim]
    scale_mlp = mods[:, 4 * dim:5 * dim]
    gate_mlp = mods[:, 5 * dim:6 * dim]

    sm_scale = 1.0 / math.sqrt(head_dim)
    acc_sc[...] = jnp.zeros_like(acc_sc)

    # Per-head attention; each head's output is folded straight into the
    # head-major out-projection accumulator (no (ts, D) head-concat scratch,
    # no masked sub-128-lane column stores).  fori_loop bounds the live range
    # of the (ts, S) score/probability intermediates.
    def head_body(h, carry):
        qh = q_ref[h]                                              # (ts, hd) bf16
        kth = kT_ref[h]                                            # (hd, S) bf16
        vh = v_ref[h]                                              # (S, hd) bf16
        scores = jnp.dot(qh, kth,
                         preferred_element_type=jnp.float32) * sm_scale
        scores = scores - jnp.max(scores, axis=-1, keepdims=True)
        p = jnp.exp(scores)
        denom = jnp.sum(p, axis=-1, keepdims=True)
        p = (p * pl.reciprocal(denom, approx=True)).astype(jnp.bfloat16)
        ah = jnp.dot(p, vh,
                     preferred_element_type=jnp.float32).astype(jnp.bfloat16)
        acc_sc[...] += jnp.dot(ah, wout_ref[h],
                               preferred_element_type=jnp.float32)
        return carry

    lax.fori_loop(0, n_heads, head_body, 0)

    x_t = x_ref[0].astype(jnp.float32)                             # (ts, D)
    # bias_dropout_add_scale (inference): residual + gate * out
    x1 = x_t + gate_msa * acc_sc[...]

    xm2 = _modulate(_layer_norm(x1, n2w_ref[...]), shift_mlp,
                    scale_mlp).astype(jnp.bfloat16)
    h1 = jnp.dot(xm2, w1_ref[...],
                 preferred_element_type=jnp.float32) + b1_ref[...]
    h1 = jax.nn.gelu(h1, approximate=True).astype(jnp.bfloat16)    # tanh GELU
    y = jnp.dot(h1, w2_ref[...],
                preferred_element_type=jnp.float32) + b2_ref[...]
    o_ref[0] = (x1 + gate_mlp * y).astype(o_ref.dtype)


def _vmem_limit_bytes():
    # Leave headroom below physical VMEM for compiler-internal scratch
    # (~48 MiB usable on v7x, ~112 MiB on v5e/v6e).
    try:
        cap = pltpu.get_tpu_info().vmem_capacity_bytes
        return max(32 * 1024 * 1024, cap - 16 * 1024 * 1024)
    except Exception:
        return 64 * 1024 * 1024


def ddit_block(x, c, cos_tab, sin_tab, params, n_heads, *, seq_tile=256):
    """DDiTBlock forward (inference).  cos_tab/sin_tab: (S, D) rotate-half tables."""
    B, S, D = x.shape
    cond = c.shape[-1]
    hidden = params["w1"].shape[-1]
    hd = D // n_heads
    ts = min(seq_tile, S)
    assert D % n_heads == 0 and hd % 2 == 0
    assert S % ts == 0 and ts % 8 == 0
    assert D % 128 == 0 and S % 128 == 0
    assert ts % 128 == 0 or ts == S          # K^T blocks put ts on the lane dim
    n_s = S // ts
    vmem_limit = _vmem_limit_bytes()

    def const(shape):
        # grid-invariant operand: single-buffered so it does not burn 2x VMEM
        return pl.BlockSpec(shape, lambda b, s: (0,) * len(shape),
                            pipeline_mode=pl.Buffered(1))

    # ---- pass 1: adaLN mods + modulated LN + QKV projection + rotary --------
    qkv_kernel = functools.partial(ddit_qkv_kernel, n_heads=n_heads, dim=D,
                                   head_dim=hd)
    mods, q_hm, kt_hm, v_hm = pl.pallas_call(
        qkv_kernel,
        grid=(B, n_s),
        in_specs=[
            pl.BlockSpec((1, 1, cond), lambda b, s: (b, 0, 0)),        # c
            pl.BlockSpec((1, ts, D), lambda b, s: (b, s, 0)),          # x tile
            pl.BlockSpec((ts, D), lambda b, s: (s, 0)),                # cos
            pl.BlockSpec((ts, D), lambda b, s: (s, 0)),                # sin
            const((cond, 6 * D)),                                      # adaLN W (f32)
            const((1, 6 * D)),                                         # adaLN b (f32)
            const((1, D)),                                             # norm1 weight
            const((D, 3 * D)),                                         # attn_qkv W (bf16)
        ],
        out_shape=(
            jax.ShapeDtypeStruct((B, 1, 6 * D), jnp.float32),          # mods
            jax.ShapeDtypeStruct((B, n_heads, S, hd), jnp.bfloat16),   # Q (rotary)
            jax.ShapeDtypeStruct((B, n_heads, hd, S), jnp.bfloat16),   # K^T (rotary)
            jax.ShapeDtypeStruct((B, n_heads, S, hd), jnp.bfloat16),   # V
        ),
        out_specs=(
            pl.BlockSpec((1, 1, 6 * D), lambda b, s: (b, 0, 0)),
            pl.BlockSpec((None, n_heads, ts, hd), lambda b, s: (b, 0, s, 0)),
            pl.BlockSpec((None, n_heads, hd, ts), lambda b, s: (b, 0, 0, s)),
            pl.BlockSpec((None, n_heads, ts, hd), lambda b, s: (b, 0, s, 0)),
        ),
        compiler_params=pltpu.CompilerParams(
            dimension_semantics=("parallel", "arbitrary"),
            vmem_limit_bytes=vmem_limit),
    )(c[:, None, :], x, cos_tab, sin_tab,
      params["wada"], params["bada"], params["n1w"], params["wqkv"])

    # ---- pass 2: attention + out-projection + gated residual + MLP ----------
    # No carried state -> both grid axes "parallel" (v7x megacore-shardable
    # even at B == 1).
    wout_hm = params["wout"].reshape(n_heads, hd, D)   # head-major out-proj W
    attn_kernel = functools.partial(ddit_attn_mlp_kernel, n_heads=n_heads,
                                    dim=D, head_dim=hd)
    out = pl.pallas_call(
        attn_kernel,
        grid=(B, n_s),
        in_specs=[
            pl.BlockSpec((1, 1, 6 * D), lambda b, s: (b, 0, 0)),               # mods
            pl.BlockSpec((1, ts, D), lambda b, s: (b, s, 0)),                  # x tile
            pl.BlockSpec((None, n_heads, ts, hd), lambda b, s: (b, 0, s, 0)),  # Q tile
            # K^T / V of the whole sequence of this batch element stay resident
            # across its seq tiles (block index depends only on b).
            # TODO(synk): add pipeline_mode=pl.Buffered(1) here if VMEM-tight on v7x.
            pl.BlockSpec((None, n_heads, hd, S), lambda b, s: (b, 0, 0, 0)),   # K^T
            pl.BlockSpec((None, n_heads, S, hd), lambda b, s: (b, 0, 0, 0)),   # V
            const((n_heads, hd, D)),                                           # attn_out W
            const((1, D)),                                                     # norm2 weight
            const((D, hidden)),                                                # mlp W1
            const((1, hidden)),                                                # mlp b1
            const((hidden, D)),                                                # mlp W2
            const((1, D)),                                                     # mlp b2
        ],
        out_shape=jax.ShapeDtypeStruct((B, S, D), x.dtype),
        out_specs=pl.BlockSpec((1, ts, D), lambda b, s: (b, s, 0)),
        scratch_shapes=[pltpu.VMEM((ts, D), jnp.float32)],  # out-proj accumulator
        compiler_params=pltpu.CompilerParams(
            dimension_semantics=("parallel", "parallel"),
            vmem_limit_bytes=vmem_limit),
    )(mods, x, q_hm, kt_hm, v_hm,
      wout_hm, params["n2w"], params["w1"], params["b1"],
      params["w2"], params["b2"])
    return out


# ------------------------------ pure-JAX reference --------------------------
def ddit_block_ref(x, c, cos_tab, sin_tab, params, n_heads):
    """Pure-JAX reference mirroring the kernel's bf16 cast points."""
    B, S, D = x.shape
    hd = D // n_heads

    mods = c.astype(jnp.float32) @ params["wada"] + params["bada"]   # (B, 6D)
    s_msa, sc_msa, g_msa, s_mlp, sc_mlp, g_mlp = [
        m[:, None, :] for m in jnp.split(mods, 6, axis=-1)]

    def ln(v, w, eps=1e-5):
        v = v.astype(jnp.float32)
        mu = jnp.mean(v, axis=-1, keepdims=True)
        var = jnp.mean((v - mu) ** 2, axis=-1, keepdims=True)
        return (v - mu) * lax.rsqrt(var + eps) * w

    xm = (ln(x, params["n1w"]) * (1.0 + sc_msa) + s_msa).astype(jnp.bfloat16)
    qkv = jnp.einsum("bsd,de->bse", xm, params["wqkv"],
                     preferred_element_type=jnp.float32)
    q, k, v = qkv[..., :D], qkv[..., D:2 * D], qkv[..., 2 * D:]

    cos = cos_tab[:, :hd].astype(jnp.float32)
    sin = sin_tab[:, :hd].astype(jnp.float32)

    def rope(t):                                      # (B, S, H, hd)
        t1, t2 = t[..., :hd // 2], t[..., hd // 2:]
        rot = jnp.concatenate([-t2, t1], axis=-1)
        return t * cos[None, :, None, :] + rot * sin[None, :, None, :]

    q = rope(q.reshape(B, S, n_heads, hd)).astype(jnp.bfloat16)
    k = rope(k.reshape(B, S, n_heads, hd)).astype(jnp.bfloat16)
    v = v.reshape(B, S, n_heads, hd).astype(jnp.bfloat16)

    scores = jnp.einsum("bqhd,bkhd->bhqk", q, k,
                        preferred_element_type=jnp.float32) / math.sqrt(hd)
    p = jax.nn.softmax(scores, axis=-1).astype(jnp.bfloat16)
    attn = jnp.einsum("bhqk,bkhd->bqhd", p, v,
                      preferred_element_type=jnp.float32)
    attn = attn.reshape(B, S, D).astype(jnp.bfloat16)
    attn_out = jnp.einsum("bsd,de->bse", attn, params["wout"],
                          preferred_element_type=jnp.float32)
    x1 = x + g_msa * attn_out

    xm2 = (ln(x1, params["n2w"]) * (1.0 + sc_mlp) + s_mlp).astype(jnp.bfloat16)
    h1 = jnp.einsum("bsd,dh->bsh", xm2, params["w1"],
                    preferred_element_type=jnp.float32) + params["b1"]
    h1 = jax.nn.gelu(h1, approximate=True).astype(jnp.bfloat16)
    y = jnp.einsum("bsh,hd->bsd", h1, params["w2"],
                   preferred_element_type=jnp.float32) + params["b2"]
    return x1 + g_mlp * y


if __name__ == "__main__":
    B, S, D, H, COND, MLP_RATIO = 2, 256, 128, 2, 64, 4
    hd = D // H
    hidden = MLP_RATIO * D

    key = jax.random.PRNGKey(0)
    ks = jax.random.split(key, 10)
    x = jax.random.normal(ks[0], (B, S, D), jnp.float32)
    c = jax.random.normal(ks[1], (B, COND), jnp.float32)

    def init_w(k, shape, fan_in, dtype):
        bound = 1.0 / math.sqrt(fan_in)
        return jax.random.uniform(k, shape, jnp.float32, -bound, bound).astype(dtype)

    # NOTE: the PyTorch __init__ zero-inits adaLN_modulation; small random
    # values are used here so the modulation/gating path is exercised.
    params = dict(
        wada=init_w(ks[2], (COND, 6 * D), COND, jnp.float32),
        bada=init_w(ks[3], (1, 6 * D), COND, jnp.float32),
        n1w=jnp.ones((1, D), jnp.float32),
        wqkv=init_w(ks[4], (D, 3 * D), D, jnp.bfloat16),
        wout=init_w(ks[5], (D, D), D, jnp.bfloat16),
        n2w=jnp.ones((1, D), jnp.float32),
        w1=init_w(ks[6], (D, hidden), D, jnp.bfloat16),
        b1=init_w(ks[7], (1, hidden), D, jnp.float32),
        w2=init_w(ks[8], (hidden, D), hidden, jnp.bfloat16),
        b2=init_w(ks[9], (1, D), hidden, jnp.float32),
    )

    # rotary tables (rotate-half convention): duplicated-frequency (S, hd) base,
    # tiled per head to lane-dense (S, D) bf16 tables.
    pos = jnp.arange(S, dtype=jnp.float32)
    inv_freq = 1.0 / (10000.0 ** (jnp.arange(0, hd, 2, dtype=jnp.float32) / hd))
    freqs = pos[:, None] * inv_freq[None, :]                        # (S, hd/2)
    cos_hd = jnp.concatenate([jnp.cos(freqs), jnp.cos(freqs)], axis=-1)
    sin_hd = jnp.concatenate([jnp.sin(freqs), jnp.sin(freqs)], axis=-1)
    cos_tab = jnp.tile(cos_hd, (1, H)).astype(jnp.bfloat16)         # (S, D)
    sin_tab = jnp.tile(sin_hd, (1, H)).astype(jnp.bfloat16)

    out = ddit_block(x, c, cos_tab, sin_tab, params, H, seq_tile=128)
    out = jax.block_until_ready(out)
    assert out.shape == (B, S, D) and out.dtype == jnp.float32

    ref = jax.block_until_ready(ddit_block_ref(x, c, cos_tab, sin_tab, params, H))
    err = float(jnp.max(jnp.abs(out - ref)))
    assert math.isfinite(err) and err < 5e-2, f"max abs err vs reference: {err}"
    print("KERNEL_OK")
</pallas_src>

<mosaic_0001>
module attributes {stable_mosaic.version = 11 : i64} {
  func.func @ddit_qkv_kernel(%arg0: i32, %arg1: i32, %arg2: memref<1x1x64xf32, #tpu.memory_space<vmem>>, %arg3: memref<1x128x128xf32, #tpu.memory_space<vmem>>, %arg4: memref<128x128xbf16, #tpu.memory_space<vmem>>, %arg5: memref<128x128xbf16, #tpu.memory_space<vmem>>, %arg6: memref<64x768xf32, #tpu.memory_space<vmem>>, %arg7: memref<1x768xf32, #tpu.memory_space<vmem>>, %arg8: memref<1x128xf32, #tpu.memory_space<vmem>>, %arg9: memref<128x384xbf16, #tpu.memory_space<vmem>>, %arg10: memref<1x1x768xf32, #tpu.memory_space<vmem>>, %arg11: memref<1x2x128x64xbf16, #tpu.memory_space<vmem>>, %arg12: memref<1x2x64x128xbf16, #tpu.memory_space<vmem>>, %arg13: memref<1x2x128x64xbf16, #tpu.memory_space<vmem>>) attributes {dimension_semantics = [#tpu.dimension_semantics<parallel>, #tpu.dimension_semantics<arbitrary>], iteration_bounds = array<i64: 2, 2>, scalar_prefetch = 0 : i64, scratch_operands = 0 : i64, tpu.core_type = #tpu.core_type<tc>, window_params = [{transform_indices = @transform_0, window_bounds = array<i64: 1, 1, 64>}, {transform_indices = @transform_1, window_bounds = array<i64: 1, 128, 128>}, {transform_indices = @transform_2, window_bounds = array<i64: 128, 128>}, {transform_indices = @transform_3, window_bounds = array<i64: 128, 128>}, {pipeline_mode = #tpu.pipeline_mode<synchronous>, transform_indices = @transform_4, window_bounds = array<i64: 64, 768>}, {pipeline_mode = #tpu.pipeline_mode<synchronous>, transform_indices = @transform_5, window_bounds = array<i64: 1, 768>}, {pipeline_mode = #tpu.pipeline_mode<synchronous>, transform_indices = @transform_6, window_bounds = array<i64: 1, 128>}, {pipeline_mode = #tpu.pipeline_mode<synchronous>, transform_indices = @transform_7, window_bounds = array<i64: 128, 384>}, {transform_indices = @transform_8, window_bounds = array<i64: 1, 1, 768>}, {transform_indices = @transform_9, window_bounds = array<i64: 1, 2, 128, 64>}, {transform_indices = @transform_10, window_bounds = array<i64: 1, 2, 64, 128>}, {transform_indices = @transform_11, window_bounds = array<i64: 1, 2, 128, 64>}]} {
    %c0_i32 = arith.constant 0 : i32
    %0 = arith.cmpi eq, %arg1, %c0_i32 : i32
    %1 = arith.extui %0 : i1 to i32
    %c0_i32_0 = arith.constant 0 : i32
    %2 = arith.cmpi ne, %1, %c0_i32_0 : i32
    scf.if %2 {
      %c0_52 = arith.constant 0 : index
      %c0_53 = arith.constant 0 : index
      %c0_54 = arith.constant 0 : index
      %114 = vector.load %arg2[%c0_52, %c0_53, %c0_54] : memref<1x1x64xf32, #tpu.memory_space<vmem>>, vector<1x1x64xf32>
      %115 = vector.shape_cast %114 : vector<1x1x64xf32> to vector<1x64xf32>
      %c0_55 = arith.constant 0 : index
      %c0_56 = arith.constant 0 : index
      %116 = vector.load %arg6[%c0_55, %c0_56] : memref<64x768xf32, #tpu.memory_space<vmem>>, vector<64x768xf32>
      %cst_57 = arith.constant dense<0.000000e+00> : vector<1x768xf32>
      %117 = tpu.matmul %115, %116, %cst_57 {dimension_numbers = #tpu.dot_dimension_numbers<[1], [0], [0], [1], [0, 0, 1, 1], [], []>} : vector<1x64xf32>, vector<64x768xf32>, vector<1x768xf32> -> vector<1x768xf32>
      %c0_58 = arith.constant 0 : index
      %c0_59 = arith.constant 0 : index
      %118 = vector.load %arg7[%c0_58, %c0_59] : memref<1x768xf32, #tpu.memory_space<vmem>>, vector<1x768xf32>
      %119 = arith.addf %117, %118 : vector<1x768xf32>
      %c0_60 = arith.constant 0 : index
      %c0_61 = arith.constant 0 : index
      %c0_62 = arith.constant 0 : index
      %120 = vector.load %arg10[%c0_60, %c0_61, %c0_62] : memref<1x1x768xf32, #tpu.memory_space<vmem>>, vector<1x1x768xf32>
      %121 = vector.shape_cast %120 : vector<1x1x768xf32> to vector<1x768xf32>
      %122 = vector.shape_cast %119 : vector<1x768xf32> to vector<1x1x768xf32>
      tpu.vector_store %arg10[%c0_60, %c0_61, %c0_62], %122 {strides = array<i32>} : memref<1x1x768xf32, #tpu.memory_space<vmem>>, vector<1x1x768xf32>,
    } else {
    }
    %c0 = arith.constant 0 : index
    %c0_1 = arith.constant 0 : index
    %c0_2 = arith.constant 0 : index
    %3 = vector.load %arg10[%c0, %c0_1, %c0_2] : memref<1x1x768xf32, #tpu.memory_space<vmem>>, vector<1x1x768xf32>
    %4 = vector.shape_cast %3 : vector<1x1x768xf32> to vector<1x768xf32>
    %5 = vector.extract_strided_slice %4 {offsets = [0, 0], sizes = [1, 128], strides = [1, 1]} : vector<1x768xf32> to vector<1x128xf32>
    %6 = vector.extract_strided_slice %4 {offsets = [0, 128], sizes = [1, 128], strides = [1, 1]} : vector<1x768xf32> to vector<1x128xf32>
    %c0_3 = arith.constant 0 : index
    %c0_4 = arith.constant 0 : index
    %c0_5 = arith.constant 0 : index
    %7 = vector.load %arg3[%c0_3, %c0_4, %c0_5] : memref<1x128x128xf32, #tpu.memory_space<vmem>>, vector<1x128x128xf32>
    %8 = vector.shape_cast %7 : vector<1x128x128xf32> to vector<128x128xf32>
    %c0_6 = arith.constant 0 : index
    %c0_7 = arith.constant 0 : index
    %9 = vector.load %arg8[%c0_6, %c0_7] : memref<1x128xf32, #tpu.memory_space<vmem>>, vector<1x128xf32>
    %cst = arith.constant dense<0.000000e+00> : vector<128xf32>
    %10 = vector.multi_reduction <add>, %8, %cst [1] : vector<128x128xf32> to vector<128xf32>
    %11 = vector.shape_cast %10 : vector<128xf32> to vector<128x1xf32>
    %cst_8 = arith.constant 1.280000e+02 : f32
    %12 = vector.broadcast %cst_8 : f32 to vector<128x1xf32>
    %13 = arith.divf %11, %12 : vector<128x1xf32>
    %14 = vector.broadcast %13 : vector<128x1xf32> to vector<128x128xf32>
    %15 = arith.subf %8, %14 : vector<128x128xf32>
    %16 = arith.mulf %15, %15 : vector<128x128xf32>
    %cst_9 = arith.constant dense<0.000000e+00> : vector<128xf32>
    %17 = vector.multi_reduction <add>, %16, %cst_9 [1] : vector<128x128xf32> to vector<128xf32>
    %18 = vector.shape_cast %17 : vector<128xf32> to vector<128x1xf32>
    %cst_10 = arith.constant 1.280000e+02 : f32
    %19 = vector.broadcast %cst_10 : f32 to vector<128x1xf32>
    %20 = arith.divf %18, %19 : vector<128x1xf32>
    %21 = vector.broadcast %13 : vector<128x1xf32> to vector<128x128xf32>
    %22 = arith.subf %8, %21 : vector<128x128xf32>
    %cst_11 = arith.constant 9.99999974E-6 : f32
    %23 = vector.broadcast %cst_11 : f32 to vector<128x1xf32>
    %24 = arith.addf %20, %23 : vector<128x1xf32>
    %25 = math.rsqrt %24 : vector<128x1xf32>
    %26 = vector.broadcast %25 : vector<128x1xf32> to vector<128x128xf32>
    %27 = arith.mulf %22, %26 : vector<128x128xf32>
    %28 = vector.broadcast %9 : vector<1x128xf32> to vector<128x128xf32>
    %29 = arith.mulf %27, %28 : vector<128x128xf32>
    %cst_12 = arith.constant 1.000000e+00 : f32
    %30 = vector.broadcast %cst_12 : f32 to vector<1x128xf32>
    %31 = arith.addf %30, %6 : vector<1x128xf32>
    %32 = vector.broadcast %31 : vector<1x128xf32> to vector<128x128xf32>
    %33 = arith.mulf %29, %32 : vector<128x128xf32>
    %34 = vector.broadcast %5 : vector<1x128xf32> to vector<128x128xf32>
    %35 = arith.addf %33, %34 : vector<128x128xf32>
    %36 = arith.truncf %35 : vector<128x128xf32> to vector<128x128xbf16>
    %c0_13 = arith.constant 0 : index
    %c0_14 = arith.constant 0 : index
    %37 = vector.load %arg9[%c0_13, %c0_14] : memref<128x384xbf16, #tpu.memory_space<vmem>>, vector<128x384xbf16>
    %cst_15 = arith.constant dense<0.000000e+00> : vector<128x384xf32>
    %38 = tpu.matmul %36, %37, %cst_15 {dimension_numbers = #tpu.dot_dimension_numbers<[1], [0], [0], [1], [0, 0, 1, 1], [], []>} : vector<128x128xbf16>, vector<128x384xbf16>, vector<128x384xf32> -> vector<128x384xf32>
    %c0_16 = arith.constant 0 : index
    %c0_17 = arith.constant 0 : index
    %39 = vector.load %arg4[%c0_16, %c0_17] : memref<128x128xbf16, #tpu.memory_space<vmem>>, vector<128x128xbf16>
    %c0_18 = arith.constant 0 : index
    %c0_19 = arith.constant 0 : index
    %40 = vector.load %arg5[%c0_18, %c0_19] : memref<128x128xbf16, #tpu.memory_space<vmem>>, vector<128x128xbf16>
    %41 = tpu.iota {dimensions = array<i32: 1>} : vector<128x128xi32>
    %c64_i32 = arith.constant 64 : i32
    %c0_i32_20 = arith.constant 0 : i32
    %42 = arith.cmpi eq, %c64_i32, %c0_i32_20 : i32
    %c1_i32 = arith.constant 1 : i32
    %43 = arith.select %42, %c1_i32, %c64_i32 : i32
    %44 = vector.broadcast %43 : i32 to vector<128x128xi32>
    %45 = arith.remsi %41, %44 : vector<128x128xi32>
    %c0_i32_21 = arith.constant 0 : i32
    %46 = vector.broadcast %c0_i32_21 : i32 to vector<128x128xi32>
    %47 = arith.cmpi ne, %45, %46 : vector<128x128xi32>
    %c0_i32_22 = arith.constant 0 : i32
    %48 = vector.broadcast %c0_i32_22 : i32 to vector<128x128xi32>
    %49 = arith.cmpi slt, %45, %48 : vector<128x128xi32>
    %c0_i32_23 = arith.constant 0 : i32
    %50 = arith.cmpi slt, %43, %c0_i32_23 : i32
    %51 = vector.broadcast %50 : i1 to vector<128x128xi1>
    %52 = vector.broadcast %51 : vector<128x128xi1> to vector<128x128xi1>
    %53 = arith.xori %49, %52 : vector<128x128xi1>
    %54 = arith.andi %53, %47 : vector<128x128xi1>
    %55 = vector.broadcast %43 : i32 to vector<128x128xi32>
    %56 = arith.addi %45, %55 : vector<128x128xi32>
    %57 = arith.select %54, %56, %45 : vector<128x128xi1>, vector<128x128xi32>
    %c32_i32 = arith.constant 32 : i32
    %58 = vector.broadcast %c32_i32 : i32 to vector<128x128xi32>
    %59 = arith.cmpi slt, %57, %58 : vector<128x128xi32>
    %60 = vector.extract_strided_slice %38 {offsets = [0, 0], sizes = [128, 128], strides = [1, 1]} : vector<128x384xf32> to vector<128x128xf32>
    %c32_i32_24 = arith.constant 32 : i32
    %61 = tpu.dynamic_rotate %60 by %c32_i32_24 dim 1 : vector<128x128xf32>, i32 -> vector<128x128xf32>
    %c96_i32 = arith.constant 96 : i32
    %62 = tpu.dynamic_rotate %60 by %c96_i32 dim 1 : vector<128x128xf32>, i32 -> vector<128x128xf32>
    %cst_25 = arith.constant 0.000000e+00 : f32
    %63 = vector.broadcast %cst_25 : f32 to vector<128x128xf32>
    %64 = arith.subf %63, %62 : vector<128x128xf32>
    %65 = arith.select %59, %64, %61 : vector<128x128xi1>, vector<128x128xf32>
    %66 = arith.extf %39 : vector<128x128xbf16> to vector<128x128xf32>
    %67 = arith.mulf %60, %66 : vector<128x128xf32>
    %68 = arith.extf %40 : vector<128x128xbf16> to vector<128x128xf32>
    %69 = arith.mulf %65, %68 : vector<128x128xf32>
    %70 = arith.addf %67, %69 : vector<128x128xf32>
    %71 = vector.extract_strided_slice %38 {offsets = [0, 128], sizes = [128, 128], strides = [1, 1]} : vector<128x384xf32> to vector<128x128xf32>
    %c32_i32_26 = arith.constant 32 : i32
    %72 = tpu.dynamic_rotate %71 by %c32_i32_26 dim 1 : vector<128x128xf32>, i32 -> vector<128x128xf32>
    %c96_i32_27 = arith.constant 96 : i32
    %73 = tpu.dynamic_rotate %71 by %c96_i32_27 dim 1 : vector<128x128xf32>, i32 -> vector<128x128xf32>
    %cst_28 = arith.constant 0.000000e+00 : f32
    %74 = vector.broadcast %cst_28 : f32 to vector<128x128xf32>
    %75 = arith.subf %74, %73 : vector<128x128xf32>
    %76 = arith.select %59, %75, %72 : vector<128x128xi1>, vector<128x128xf32>
    %77 = arith.extf %39 : vector<128x128xbf16> to vector<128x128xf32>
    %78 = arith.mulf %71, %77 : vector<128x128xf32>
    %79 = arith.extf %40 : vector<128x128xbf16> to vector<128x128xf32>
    %80 = arith.mulf %76, %79 : vector<128x128xf32>
    %81 = arith.addf %78, %80 : vector<128x128xf32>
    %82 = vector.extract_strided_slice %38 {offsets = [0, 256], sizes = [128, 128], strides = [1, 1]} : vector<128x384xf32> to vector<128x128xf32>
    %83 = tpu.transpose %81, [1, 0] : vector<128x128xf32> -> vector<128x128xf32>
    %84 = vector.extract_strided_slice %70 {offsets = [0, 0], sizes = [128, 64], strides = [1, 1]} : vector<128x128xf32> to vector<128x64xf32>
    %85 = arith.truncf %84 : vector<128x64xf32> to vector<128x64xbf16>
    %c0_29 = arith.constant 0 : index
    %c0_30 = arith.constant 0 : index
    %c0_31 = arith.constant 0 : index
    %c0_32 = arith.constant 0 : index
    %86 = vector.load %arg11[%c0_29, %c0_30, %c0_31, %c0_32] : memref<1x2x128x64xbf16, #tpu.memory_space<vmem>>, vector<1x1x128x64xbf16>
    %87 = vector.shape_cast %86 : vector<1x1x128x64xbf16> to vector<128x64xbf16>
    %88 = vector.shape_cast %85 : vector<128x64xbf16> to vector<1x1x128x64xbf16>
    tpu.vector_store %arg11[%c0_29, %c0_30, %c0_31, %c0_32], %88 {strides = array<i32>} : memref<1x2x128x64xbf16, #tpu.memory_space<vmem>>, vector<1x1x128x64xbf16>,
    %89 = vector.extract_strided_slice %83 {offsets = [0, 0], sizes = [64, 128], strides = [1, 1]} : vector<128x128xf32> to vector<64x128xf32>
    %90 = arith.truncf %89 : vector<64x128xf32> to vector<64x128xbf16>
    %c0_33 = arith.constant 0 : index
    %c0_34 = arith.constant 0 : index
    %c0_35 = arith.constant 0 : index
    %c0_36 = arith.constant 0 : index
    %91 = vector.load %arg12[%c0_33, %c0_34, %c0_35, %c0_36] : memref<1x2x64x128xbf16, #tpu.memory_space<vmem>>, vector<1x1x64x128xbf16>
    %92 = vector.shape_cast %91 : vector<1x1x64x128xbf16> to vector<64x128xbf16>
    %93 = vector.shape_cast %90 : vector<64x128xbf16> to vector<1x1x64x128xbf16>
    tpu.vector_store %arg12[%c0_33, %c0_34, %c0_35, %c0_36], %93 {strides = array<i32>} : memref<1x2x64x128xbf16, #tpu.memory_space<vmem>>, vector<1x1x64x128xbf16>,
    %94 = vector.extract_strided_slice %82 {offsets = [0, 0], sizes = [128, 64], strides = [1, 1]} : vector<128x128xf32> to vector<128x64xf32>
    %95 = arith.truncf %94 : vector<128x64xf32> to vector<128x64xbf16>
    %c0_37 = arith.constant 0 : index
    %c0_38 = arith.constant 0 : index
    %c0_39 = arith.constant 0 : index
    %c0_40 = arith.constant 0 : index
    %96 = vector.load %arg13[%c0_37, %c0_38, %c0_39, %c0_40] : memref<1x2x128x64xbf16, #tpu.memory_space<vmem>>, vector<1x1x128x64xbf16>
    %97 = vector.shape_cast %96 : vector<1x1x128x64xbf16> to vector<128x64xbf16>
    %98 = vector.shape_cast %95 : vector<128x64xbf16> to vector<1x1x128x64xbf16>
    tpu.vector_store %arg13[%c0_37, %c0_38, %c0_39, %c0_40], %98 {strides = array<i32>} : memref<1x2x128x64xbf16, #tpu.memory_space<vmem>>, vector<1x1x128x64xbf16>,
    %99 = vector.extract_strided_slice %70 {offsets = [0, 64], sizes = [128, 64], strides = [1, 1]} : vector<128x128xf32> to vector<128x64xf32>
    %100 = arith.truncf %99 : vector<128x64xf32> to vector<128x64xbf16>
    %c0_41 = arith.constant 0 : index
    %c1 = arith.constant 1 : index
    %c0_42 = arith.constant 0 : index
    %c0_43 = arith.constant 0 : index
    %101 = vector.load %arg11[%c0_41, %c1, %c0_42, %c0_43] : memref<1x2x128x64xbf16, #tpu.memory_space<vmem>>, vector<1x1x128x64xbf16>
    %102 = vector.shape_cast %101 : vector<1x1x128x64xbf16> to vector<128x64xbf16>
    %103 = vector.shape_cast %100 : vector<128x64xbf16> to vector<1x1x128x64xbf16>
    tpu.vector_store %arg11[%c0_41, %c1, %c0_42, %c0_43], %103 {strides = array<i32>} : memref<1x2x128x64xbf16, #tpu.memory_space<vmem>>, vector<1x1x128x64xbf16>,
    %104 = vector.extract_strided_slice %83 {offsets = [64, 0], sizes = [64, 128], strides = [1, 1]} : vector<128x128xf32> to vector<64x128xf32>
    %105 = arith.truncf %104 : vector<64x128xf32> to vector<64x128xbf16>
    %c0_44 = arith.constant 0 : index
    %c1_45 = arith.constant 1 : index
    %c0_46 = arith.constant 0 : index
    %c0_47 = arith.constant 0 : index
    %106 = vector.load %arg12[%c0_44, %c1_45, %c0_46, %c0_47] : memref<1x2x64x128xbf16, #tpu.memory_space<vmem>>, vector<1x1x64x128xbf16>
    %107 = vector.shape_cast %106 : vector<1x1x64x128xbf16> to vector<64x128xbf16>
    %108 = vector.shape_cast %105 : vector<64x128xbf16> to vector<1x1x64x128xbf16>
    tpu.vector_store %arg12[%c0_44, %c1_45, %c0_46, %c0_47], %108 {strides = array<i32>} : memref<1x2x64x128xbf16, #tpu.memory_space<vmem>>, vector<1x1x64x128xbf16>,
    %109 = vector.extract_strided_slice %82 {offsets = [0, 64], sizes = [128, 64], strides = [1, 1]} : vector<128x128xf32> to vector<128x64xf32>
    %110 = arith.truncf %109 : vector<128x64xf32> to vector<128x64xbf16>
    %c0_48 = arith.constant 0 : index
    %c1_49 = arith.constant 1 : index
    %c0_50 = arith.constant 0 : index
    %c0_51 = arith.constant 0 : index
    %111 = vector.load %arg13[%c0_48, %c1_49, %c0_50, %c0_51] : memref<1x2x128x64xbf16, #tpu.memory_space<vmem>>, vector<1x1x128x64xbf16>
    %112 = vector.shape_cast %111 : vector<1x1x128x64xbf16> to vector<128x64xbf16>
    %113 = vector.shape_cast %110 : vector<128x64xbf16> to vector<1x1x128x64xbf16>
    tpu.vector_store %arg13[%c0_48, %c1_49, %c0_50, %c0_51], %113 {strides = array<i32>} : memref<1x2x128x64xbf16, #tpu.memory_space<vmem>>, vector<1x1x128x64xbf16>,
    return
  }
  func.func @transform_0(%arg0: i32, %arg1: i32) -> (i32, i32, i32) {
    %c0_i32 = arith.constant 0 : i32
    %c0_i32_0 = arith.constant 0 : i32
    %c0_i32_1 = arith.constant 0 : i32
    return %arg0, %c0_i32, %c0_i32_0 : i32, i32, i32
  }
  func.func @transform_1(%arg0: i32, %arg1: i32) -> (i32, i32, i32) {
    %c0_i32 = arith.constant 0 : i32
    %c0_i32_0 = arith.constant 0 : i32
    return %arg0, %arg1, %c0_i32 : i32, i32, i32
  }
  func.func @transform_2(%arg0: i32, %arg1: i32) -> (i32, i32) {
    %c0_i32 = arith.constant 0 : i32
    %c0_i32_0 = arith.constant 0 : i32
    return %arg1, %c0_i32 : i32, i32
  }
  func.func @transform_3(%arg0: i32, %arg1: i32) -> (i32, i32) {
    %c0_i32 = arith.constant 0 : i32
    %c0_i32_0 = arith.constant 0 : i32
    return %arg1, %c0_i32 : i32, i32
  }
  func.func @transform_4(%arg0: i32, %arg1: i32) -> (i32, i32) {
    %c0_i32 = arith.constant 0 : i32
    %c0_i32_0 = arith.constant 0 : i32
    %c0_i32_1 = arith.constant 0 : i32
    return %c0_i32, %c0_i32_0 : i32, i32
  }
  func.func @transform_5(%arg0: i32, %arg1: i32) -> (i32, i32) {
    %c0_i32 = arith.constant 0 : i32
    %c0_i32_0 = arith.constant 0 : i32
    %c0_i32_1 = arith.constant 0 : i32
    return %c0_i32, %c0_i32_0 : i32, i32
  }
  func.func @transform_6(%arg0: i32, %arg1: i32) -> (i32, i32) {
    %c0_i32 = arith.constant 0 : i32
    %c0_i32_0 = arith.constant 0 : i32
    %c0_i32_1 = arith.constant 0 : i32
    return %c0_i32, %c0_i32_0 : i32, i32
  }
  func.func @transform_7(%arg0: i32, %arg1: i32) -> (i32, i32) {
    %c0_i32 = arith.constant 0 : i32
    %c0_i32_0 = arith.constant 0 : i32
    %c0_i32_1 = arith.constant 0 : i32
    return %c0_i32, %c0_i32_0 : i32, i32
  }
  func.func @transform_8(%arg0: i32, %arg1: i32) -> (i32, i32, i32) {
    %c0_i32 = arith.constant 0 : i32
    %c0_i32_0 = arith.constant 0 : i32
    %c0_i32_1 = arith.constant 0 : i32
    return %arg0, %c0_i32, %c0_i32_0 : i32, i32, i32
  }
  func.func @transform_9(%arg0: i32, %arg1: i32) -> (i32, i32, i32, i32) {
    %c0_i32 = arith.constant 0 : i32
    %c0_i32_0 = arith.constant 0 : i32
    %c0_i32_1 = arith.constant 0 : i32
    return %arg0, %c0_i32, %arg1, %c0_i32_0 : i32, i32, i32, i32
  }
  func.func @transform_10(%arg0: i32, %arg1: i32) -> (i32, i32, i32, i32) {
    %c0_i32 = arith.constant 0 : i32
    %c0_i32_0 = arith.constant 0 : i32
    %c0_i32_1 = arith.constant 0 : i32
    return %arg0, %c0_i32, %c0_i32_0, %arg1 : i32, i32, i32, i32
  }
  func.func @transform_11(%arg0: i32, %arg1: i32) -> (i32, i32, i32, i32) {
    %c0_i32 = arith.constant 0 : i32
    %c0_i32_0 = arith.constant 0 : i32
    %c0_i32_1 = arith.constant 0 : i32
    return %arg0, %c0_i32, %arg1, %c0_i32_0 : i32, i32, i32, i32
  }
}

</mosaic_0001>

<llo_original>
// kernel: tpu_custom_call.1
$region0: #{tpu_custom_call.1}
  #allocation0 [shape = 'u32[]', space=smem, size = 0x4, offset = 0x4, fixed_abs, tag = 'smem constant byte address 0x4 - core index']
  #allocation1 [shape = 'u32[144,128]{1,0:T(1,128)}', space=vmem, size = 0x12000, scoped, tag = 'internal scratch']
  #allocation22 [shape = 's32[]', space=sflag, size = 0x4, offset = 0, fixed_abs, tag = 'sflag constant byte address 0x0 - dummy sync flag']
  #allocation24 [shape = 's32[]', space=sflag, size = 0x4, offset = 0, fixed_abs, tag = 'sflag constant byte address 0x0 - dummy sync flag']
  %s0 = inlined_call_operand.hbm [shape: f32[2,1,64], index: 0, kind: input, shape index: {}]
  %s1 = inlined_call_operand.hbm [shape: f32[2,256,128], index: 1, kind: input, shape index: {}]
  %s2 = inlined_call_operand.hbm [shape: bf16[256,128], index: 2, kind: input, shape index: {}]
  %s3 = inlined_call_operand.hbm [shape: bf16[256,128], index: 3, kind: input, shape index: {}]
  %s4 = inlined_call_operand.hbm [shape: f32[64,768], index: 4, kind: input, shape index: {}]
  %s5 = inlined_call_operand.hbm [shape: f32[1,768], index: 5, kind: input, shape index: {}]
  %s6 = inlined_call_operand.hbm [shape: f32[1,128], index: 6, kind: input, shape index: {}]
  %s7 = inlined_call_operand.hbm [shape: bf16[128,384], index: 7, kind: input, shape index: {}]
  %s8 = inlined_call_operand.hbm [shape: f32[2,1,768], index: 8, kind: output, shape index: {0}]
  %s9 = inlined_call_operand.hbm [shape: bf16[2,2,256,64], index: 9, kind: output, shape index: {1}]
  %s10 = inlined_call_operand.hbm [shape: bf16[2,2,64,256], index: 10, kind: output, shape index: {2}]
  %s11 = inlined_call_operand.hbm [shape: bf16[2,2,256,64], index: 11, kind: output, shape index: {3}]
  %12 = xla_tuple %s8, %s9, %s10, %s11
  %s13 = sld [smem:[#allocation0]]
  $region125: #{tpu_custom_call.1} parent=0
    _
  %s15 = ssub.s32 1, %s13
  %s16 = scalar_select 0, %s15, %s13
  $region1: #{tpu_custom_call.1} parent=0
    #allocation2 [shape = 'u8[1024]{0}', space=vmem, size = 0x400, scoped, tag = 'input window, operand 0']
    #allocation3 [shape = 's32[2]{0}', space=sflag, size = 0x8, scoped, tag = 'scoped memory for tpu_custom_call.1']
    #allocation4 [shape = 's32[2]{0}', space=sflag, size = 0x8, scoped, tag = 'scoped memory for tpu_custom_call.1']
    #allocation5 [shape = 'u8[131072]{0}', space=vmem, size = 0x20000, scoped, tag = 'input window, operand 1']
    #allocation6 [shape = 's32[2]{0}', space=sflag, size = 0x8, scoped, tag = 'scoped memory for tpu_custom_call.1']
    #allocation7 [shape = 'u8[65536]{0}', space=vmem, size = 0x10000, scoped, tag = 'input window, operand 2']
    #allocation8 [shape = 'u8[65536]{0}', space=vmem, size = 0x10000, scoped, tag = 'input window, operand 3']
    #allocation9 [shape = 's32[2]{0}', space=sflag, size = 0x8, scoped, tag = 'scoped memory for tpu_custom_call.1']
    #allocation10 [shape = 'u8[196608]{0}', space=vmem, size = 0x30000, scoped, tag = 'input window, operand 4, single buffered']
    #allocation11 [shape = 'u8[3072]{0}', space=vmem, size = 0xc00, scoped, tag = 'input window, operand 5, single buffered']
    #allocation12 [shape = 's32[1]{0}', space=sflag, size = 0x4, scoped, tag = 'scoped memory for tpu_custom_call.1']
    #allocation13 [shape = 'u8[512]{0}', space=vmem, size = 0x400, scoped, tag = 'input window, operand 6, single buffered']
    #allocation14 [shape = 'u8[98304]{0}', space=vmem, size = 0x18000, scoped, tag = 'input window, operand 7, single buffered']
    #allocation15 [shape = 's32[1]{0}', space=sflag, size = 0x4, scoped, tag = 'scoped memory for tpu_custom_call.1']
    #allocation16 [shape = 'u8[6144]{0}', space=vmem, size = 0x1800, scoped, tag = 'output window, operand 0']
    #allocation17 [shape = 'u8[131072]{0}', space=vmem, size = 0x20000, scoped, tag = 'output window, operand 1']
    #allocation18 [shape = 's32[2]{0}', space=sflag, size = 0x8, scoped, tag = 'scoped memory for tpu_custom_call.1']
    #allocation19 [shape = 'u8[65536]{0}', space=vmem, size = 0x10000, scoped, tag = 'output window, operand 2']
    #allocation20 [shape = 'u8[131072]{0}', space=vmem, size = 0x20000, scoped, tag = 'output window, operand 3']
    #allocation21 [shape = 's32[2]{0}', space=sflag, size = 0x8, scoped, tag = 'scoped memory for tpu_custom_call.1']
    %17 = vsyncpa [#allocation3], 0
    %s18 = scalar_lea.sflag [#allocation3], 1
    %19 = vsyncpa %s18, 0
    %20 = vsyncpa [#allocation6], 0
    %s21 = scalar_lea.sflag [#allocation6], 1
    %22 = vsyncpa %s21, 0
    %23 = vsyncpa [#allocation9], 0
    %s24 = scalar_lea.sflag [#allocation9], 1
    %25 = vsyncpa %s24, 0
    %26 = vsyncpa [#allocation12], 0
    %27 = vsyncpa [#allocation15], 0
    %28 = vsyncpa [#allocation4], 0
    %s29 = scalar_lea.sflag [#allocation4], 1
    %30 = vsyncpa %s29, 0
    %31 = vsyncpa [#allocation18], 0
    %s32 = scalar_lea.sflag [#allocation18], 1
    %33 = vsyncpa %s32, 0
    %34 = vsyncpa [#allocation21], 0
    %s35 = scalar_lea.sflag [#allocation21], 1
    %36 = vsyncpa %s35, 0
    loop: start=0, step=1, limit=6
    $region2: #{tpu_custom_call.1} parent=1 // loop_pre_header
      _
    $region3: #{tpu_custom_call.1} parent=1 // loop_header
      %s38 = sphi 0, %s42
      %p39 = scmp.ge.s32.totalorder %s38, 6
      %s45 = sphi 0, %s57
      %s46 = sphi 0, %s53
      %s47 = sphi 0, %s45
      %s48 = sphi 0, %s46
      %s49 = sphi 0, %s47
      %s50 = sphi 0, %s48
      %s60 = sphi 0, %s62
      %s63 = sphi 0, %s60
      %s64 = sphi 0, %s63
      %s80 = sphi 0, %s64
      %s88 = sphi 0, %s90
      %s91 = sphi 0, %s88
      %s92 = sphi 0, %s91
      %s108 = sphi 0, %s92
      %s114 = sphi 0, %s116
      %s117 = sphi 0, %s114
      %s118 = sphi 0, %s117
      %s134 = sphi 0, %s118
      %s140 = sphi 0, %s142
      %s143 = sphi 0, %s140
      %s144 = sphi 0, %s143
      %s160 = sphi 0, %s144
      %s164 = sphi 0, %s164
      %s166 = sphi 0, %s164
      %s167 = sphi 0, %s166
      %s181 = sphi 0, %s167
      %s185 = sphi 0, %s185
      %s187 = sphi 0, %s185
      %s188 = sphi 0, %s187
      %s202 = sphi 0, %s188
      %s206 = sphi 0, %s206
      %s208 = sphi 0, %s206
      %s209 = sphi 0, %s208
      %s223 = sphi 0, %s209
      %s227 = sphi 0, %s227
      %s229 = sphi 0, %s227
      %s230 = sphi 0, %s229
      %s244 = sphi 0, %s230
      %s250 = sphi 0, %s252
      %s253 = sphi 0, %s250
      %s254 = sphi 0, %s253
      %s270 = sphi 0, %s254
      %s278 = sphi 0, %s280
      %s281 = sphi 0, %s278
      %s282 = sphi 0, %s281
      %s298 = sphi 0, %s282
      %s306 = sphi 0, %s308
      %s309 = sphi 0, %s306
      %s310 = sphi 0, %s309
      %s326 = sphi 0, %s310
      %s334 = sphi 0, %s336
      %s337 = sphi 0, %s334
      %s338 = sphi 0, %s337
      %s354 = sphi 0, %s338
    $region4: #{tpu_custom_call.1} parent=1 // loop_header_branch
      %41 = sbr.rel (%p39) target = $region8
    $region5: #{tpu_custom_call.1} parent=1 // loop_body
      %s43 = ssub.s32 %s38, 1
      %s44 = ssub.s32 %s38, 2
      %s51 = sadd.s32 1, %s46
      %p52 = scmp.ge.s32.totalorder %s51, 2
      %s53 = scalar_select %p52, 0, %s51
      %s54 = sadd.s32 1, %s45
      %s55 = scalar_select %p52, %s54, %s45
      %p56 = scmp.ge.s32.totalorder %s55, 2
      %s57 = scalar_select %p56, 0, %s55
      %s58 = ssub.s32 %s45, %s57
      %p59 = scmp.eq.s32.totalorder %s58, 0
      %s61 = sadd.s32 %s60, 1
      %s62 = scalar_select %p59, %s60, %s61
      %p65 = pneg %p59
      %p66 = scmp.eq.s32.totalorder %s38, 3
      %p67 = por %p65, %p66
      %p68 = scmp.ne.s32.totalorder %s60, %s63
      %p69 = scmp.eq.s32.totalorder %s38, 0
      %p70 = por %p68, %p69
      %p71 = scmp.ne.s32.totalorder %s60, %s63
      %p72 = scmp.eq.s32.totalorder %s43, 3
      %p73 = por %p71, %p72
      %p74 = scmp.ne.s32.totalorder %s63, %s64
      %p75 = scmp.eq.s32.totalorder %s43, 0
      %p76 = por %p74, %p75
      %p77 = scmp.ne.s32.totalorder %s63, %s64
      %p78 = scmp.eq.s32.totalorder %s44, 3
      %p79 = por %p77, %p78
      %p81 = scmp.ne.s32.totalorder %s64, %s80
      %p82 = scmp.eq.s32.totalorder %s44, 0
      %p83 = por %p81, %p82
      %s84 = ssub.s32 %s45, %s57
      %s85 = ssub.s32 %s46, %s53
      %s86 = sor.u32 %s84, %s85
      %p87 = scmp.eq.s32.totalorder %s86, 0
      %s89 = sadd.s32 %s88, 1
      %s90 = scalar_select %p87, %s88, %s89
      %p93 = pneg %p87
      %p94 = scmp.eq.s32.totalorder %s38, 3
      %p95 = por %p93, %p94
      %p96 = scmp.ne.s32.totalorder %s88, %s91
      %p97 = scmp.eq.s32.totalorder %s38, 0
      %p98 = por %p96, %p97
      %p99 = scmp.ne.s32.totalorder %s88, %s91
      %p100 = scmp.eq.s32.totalorder %s43, 3
      %p101 = por %p99, %p100
      %p102 = scmp.ne.s32.totalorder %s91, %s92
      %p103 = scmp.eq.s32.totalorder %s43, 0
      %p104 = por %p102, %p103
      %p105 = scmp.ne.s32.totalorder %s91, %s92
      %p106 = scmp.eq.s32.totalorder %s44, 3
      %p107 = por %p105, %p106
      %p109 = scmp.ne.s32.totalorder %s92, %s108
      %p110 = scmp.eq.s32.totalorder %s44, 0
      %p111 = por %p109, %p110
      %s112 = ssub.s32 %s46, %s53
      %p113 = scmp.eq.s32.totalorder %s112, 0
      %s115 = sadd.s32 %s114, 1
      %s116 = scalar_select %p113, %s114, %s115
      %p119 = pneg %p113
      %p120 = scmp.eq.s32.totalorder %s38, 3
      %p121 = por %p119, %p120
      %p122 = scmp.ne.s32.totalorder %s114, %s117
      %p123 = scmp.eq.s32.totalorder %s38, 0
      %p124 = por %p122, %p123
      %p125 = scmp.ne.s32.totalorder %s114, %s117
      %p126 = scmp.eq.s32.totalorder %s43, 3
      %p127 = por %p125, %p126
      %p128 = scmp.ne.s32.totalorder %s117, %s118
      %p129 = scmp.eq.s32.totalorder %s43, 0
      %p130 = por %p128, %p129
      %p131 = scmp.ne.s32.totalorder %s117, %s118
      %p132 = scmp.eq.s32.totalorder %s44, 3
      %p133 = por %p131, %p132
      %p135 = scmp.ne.s32.totalorder %s118, %s134
      %p136 = scmp.eq.s32.totalorder %s44, 0
      %p137 = por %p135, %p136
      %s138 = ssub.s32 %s46, %s53
      %p139 = scmp.eq.s32.totalorder %s138, 0
      %s141 = sadd.s32 %s140, 1
      %s142 = scalar_select %p139, %s140, %s141
      %p145 = pneg %p139
      %p146 = scmp.eq.s32.totalorder %s38, 3
      %p147 = por %p145, %p146
      %p148 = scmp.ne.s32.totalorder %s140, %s143
      %p149 = scmp.eq.s32.totalorder %s38, 0
      %p150 = por %p148, %p149
      %p151 = scmp.ne.s32.totalorder %s140, %s143
      %p152 = scmp.eq.s32.totalorder %s43, 3
      %p153 = por %p151, %p152
      %p154 = scmp.ne.s32.totalorder %s143, %s144
      %p155 = scmp.eq.s32.totalorder %s43, 0
      %p156 = por %p154, %p155
      %p157 = scmp.ne.s32.totalorder %s143, %s144
      %p158 = scmp.eq.s32.totalorder %s44, 3
      %p159 = por %p157, %p158
      %p161 = scmp.ne.s32.totalorder %s144, %s160
      %p162 = scmp.eq.s32.totalorder %s44, 0
      %p163 = por %p161, %p162
      %s165 = sadd.s32 %s164, 1
      %p168 = scmp.eq.s32.totalorder %s38, 3
      %p169 = scmp.ne.s32.totalorder %s164, %s166
      %p170 = scmp.eq.s32.totalorder %s38, 0
      %p171 = por %p169, %p170
      %p172 = scmp.ne.s32.totalorder %s164, %s166
      %p173 = scmp.eq.s32.totalorder %s43, 3
      %p174 = por %p172, %p173
      %p175 = scmp.ne.s32.totalorder %s166, %s167
      %p176 = scmp.eq.s32.totalorder %s43, 0
      %p177 = por %p175, %p176
      %p178 = scmp.ne.s32.totalorder %s166, %s167
      %p179 = scmp.eq.s32.totalorder %s44, 3
      %p180 = por %p178, %p179
      %p182 = scmp.ne.s32.totalorder %s167, %s181
      %p183 = scmp.eq.s32.totalorder %s44, 0
      %p184 = por %p182, %p183
      %s186 = sadd.s32 %s185, 1
      %p189 = scmp.eq.s32.totalorder %s38, 3
      %p190 = scmp.ne.s32.totalorder %s185, %s187
      %p191 = scmp.eq.s32.totalorder %s38, 0
      %p192 = por %p190, %p191
      %p193 = scmp.ne.s32.totalorder %s185, %s187
      %p194 = scmp.eq.s32.totalorder %s43, 3
      %p195 = por %p193, %p194
      %p196 = scmp.ne.s32.totalorder %s187, %s188
      %p197 = scmp.eq.s32.totalorder %s43, 0
      %p198 = por %p196, %p197
      %p199 = scmp.ne.s32.totalorder %s187, %s188
      %p200 = scmp.eq.s32.totalorder %s44, 3
      %p201 = por %p199, %p200
      %p203 = scmp.ne.s32.totalorder %s188, %s202
      %p204 = scmp.eq.s32.totalorder %s44, 0
      %p205 = por %p203, %p204
      %s207 = sadd.s32 %s206, 1
      %p210 = scmp.eq.s32.totalorder %s38, 3
      %p211 = scmp.ne.s32.totalorder %s206, %s208
      %p212 = scmp.eq.s32.totalorder %s38, 0
      %p213 = por %p211, %p212
      %p214 = scmp.ne.s32.totalorder %s206, %s208
      %p215 = scmp.eq.s32.totalorder %s43, 3
      %p216 = por %p214, %p215
      %p217 = scmp.ne.s32.totalorder %s208, %s209
      %p218 = scmp.eq.s32.totalorder %s43, 0
      %p219 = por %p217, %p218
      %p220 = scmp.ne.s32.totalorder %s208, %s209
      %p221 = scmp.eq.s32.totalorder %s44, 3
      %p222 = por %p220, %p221
      %p224 = scmp.ne.s32.totalorder %s209, %s223
      %p225 = scmp.eq.s32.totalorder %s44, 0
      %p226 = por %p224, %p225
      %s228 = sadd.s32 %s227, 1
      %p231 = scmp.eq.s32.totalorder %s38, 3
      %p232 = scmp.ne.s32.totalorder %s227, %s229
      %p233 = scmp.eq.s32.totalorder %s38, 0
      %p234 = por %p232, %p233
      %p235 = scmp.ne.s32.totalorder %s227, %s229
      %p236 = scmp.eq.s32.totalorder %s43, 3
      %p237 = por %p235, %p236
      %p238 = scmp.ne.s32.totalorder %s229, %s230
      %p239 = scmp.eq.s32.totalorder %s43, 0
      %p240 = por %p238, %p239
      %p241 = scmp.ne.s32.totalorder %s229, %s230
      %p242 = scmp.eq.s32.totalorder %s44, 3
      %p243 = por %p241, %p242
      %p245 = scmp.ne.s32.totalorder %s230, %s244
      %p246 = scmp.eq.s32.totalorder %s44, 0
      %p247 = por %p245, %p246
      %s248 = ssub.s32 %s45, %s57
      %p249 = scmp.eq.s32.totalorder %s248, 0
      %s251 = sadd.s32 %s250, 1
      %s252 = scalar_select %p249, %s250, %s251
      %p255 = pneg %p249
      %p256 = scmp.eq.s32.totalorder %s38, 3
      %p257 = por %p255, %p256
      %p258 = scmp.ne.s32.totalorder %s250, %s253
      %p259 = scmp.eq.s32.totalorder %s38, 0
      %p260 = por %p258, %p259
      %p261 = scmp.ne.s32.totalorder %s250, %s253
      %p262 = scmp.eq.s32.totalorder %s43, 3
      %p263 = por %p261, %p262
      %p264 = scmp.ne.s32.totalorder %s253, %s254
      %p265 = scmp.eq.s32.totalorder %s43, 0
      %p266 = por %p264, %p265
      %p267 = scmp.ne.s32.totalorder %s253, %s254
      %p268 = scmp.eq.s32.totalorder %s44, 3
      %p269 = por %p267, %p268
      %p271 = scmp.ne.s32.totalorder %s254, %s270
      %p272 = scmp.eq.s32.totalorder %s44, 0
      %p273 = por %p271, %p272
      %s274 = ssub.s32 %s45, %s57
      %s275 = ssub.s32 %s46, %s53
      %s276 = sor.u32 %s274, %s275
      %p277 = scmp.eq.s32.totalorder %s276, 0
      %s279 = sadd.s32 %s278, 1
      %s280 = scalar_select %p277, %s278, %s279
      %p283 = pneg %p277
      %p284 = scmp.eq.s32.totalorder %s38, 3
      %p285 = por %p283, %p284
      %p286 = scmp.ne.s32.totalorder %s278, %s281
      %p287 = scmp.eq.s32.totalorder %s38, 0
      %p288 = por %p286, %p287
      %p289 = scmp.ne.s32.totalorder %s278, %s281
      %p290 = scmp.eq.s32.totalorder %s43, 3
      %p291 = por %p289, %p290
      %p292 = scmp.ne.s32.totalorder %s281, %s282
      %p293 = scmp.eq.s32.totalorder %s43, 0
      %p294 = por %p292, %p293
      %p295 = scmp.ne.s32.totalorder %s281, %s282
      %p296 = scmp.eq.s32.totalorder %s44, 3
      %p297 = por %p295, %p296
      %p299 = scmp.ne.s32.totalorder %s282, %s298
      %p300 = scmp.eq.s32.totalorder %s44, 0
      %p301 = por %p299, %p300
      %s302 = ssub.s32 %s45, %s57
      %s303 = ssub.s32 %s46, %s53
      %s304 = sor.u32 %s302, %s303
      %p305 = scmp.eq.s32.totalorder %s304, 0
      %s307 = sadd.s32 %s306, 1
      %s308 = scalar_select %p305, %s306, %s307
      %p311 = pneg %p305
      %p312 = scmp.eq.s32.totalorder %s38, 3
      %p313 = por %p311, %p312
      %p314 = scmp.ne.s32.totalorder %s306, %s309
      %p315 = scmp.eq.s32.totalorder %s38, 0
      %p316 = por %p314, %p315
      %p317 = scmp.ne.s32.totalorder %s306, %s309
      %p318 = scmp.eq.s32.totalorder %s43, 3
      %p319 = por %p317, %p318
      %p320 = scmp.ne.s32.totalorder %s309, %s310
      %p321 = scmp.eq.s32.totalorder %s43, 0
      %p322 = por %p320, %p321
      %p323 = scmp.ne.s32.totalorder %s309, %s310
      %p324 = scmp.eq.s32.totalorder %s44, 3
      %p325 = por %p323, %p324
      %p327 = scmp.ne.s32.totalorder %s310, %s326
      %p328 = scmp.eq.s32.totalorder %s44, 0
      %p329 = por %p327, %p328
      %s330 = ssub.s32 %s45, %s57
      %s331 = ssub.s32 %s46, %s53
      %s332 = sor.u32 %s330, %s331
      %p333 = scmp.eq.s32.totalorder %s332, 0
      %s335 = sadd.s32 %s334, 1
      %s336 = scalar_select %p333, %s334, %s335
      %p339 = pneg %p333
      %p340 = scmp.eq.s32.totalorder %s38, 3
      %p341 = por %p339, %p340
      %p342 = scmp.ne.s32.totalorder %s334, %s337
      %p343 = scmp.eq.s32.totalorder %s38, 0
      %p344 = por %p342, %p343
      %p345 = scmp.ne.s32.totalorder %s334, %s337
      %p346 = scmp.eq.s32.totalorder %s43, 3
      %p347 = por %p345, %p346
      %p348 = scmp.ne.s32.totalorder %s337, %s338
      %p349 = scmp.eq.s32.totalorder %s43, 0
      %p350 = por %p348, %p349
      %p351 = scmp.ne.s32.totalorder %s337, %s338
      %p352 = scmp.eq.s32.totalorder %s44, 3
      %p353 = por %p351, %p352
      %p355 = scmp.ne.s32.totalorder %s338, %s354
      %p356 = scmp.eq.s32.totalorder %s44, 0
      %p357 = por %p355, %p356
      %p358 = scmp.le.s32.totalorder 1, %s38
      %p359 = scmp.lt.s32.totalorder %s38, 5
      %p360 = pnand %p358, %p359
      %p361 = pneg %p360
      // Predicated region
      $region9: #{tpu_custom_call.1} parent=5 // pred_check
        _
      $region10: #{tpu_custom_call.1} parent=5 // pred_check_branch
        %363 = sbr.rel (%p360) target = $region12
      $region11: #{tpu_custom_call.1} parent=5 // pred_region
        %s364 = ssub.s32 %s38, 1
        // Predicated region
        $region13: #{tpu_custom_call.1} parent=11 // pred_check
          %p365 = pneg %p177
        $region14: #{tpu_custom_call.1} parent=11 // pred_check_branch
          %367 = sbr.rel (%p365) target = $region16
        $region15: #{tpu_custom_call.1} parent=11 // pred_region
          %s369 = ssub.s32 6144, 6144
          %370 = vsyncadd [#allocation9], %s369
          %s371 = sshll.u32 [#allocation10], 4
          %s372 = int_to_ptr.vmem [resolvable:$true] %s371
          %377 = dma.hbm_to_vmem [thread:$0]  %s4, 6144, %s372, [#allocation9], 768, 768, 48
        $region16: #{tpu_custom_call.1} parent=11 // pred_fallthru
          _
        // Predicated region
        $region17: #{tpu_custom_call.1} parent=11 // pred_check
          %p378 = pneg %p198
        $region18: #{tpu_custom_call.1} parent=11 // pred_check_branch
          %380 = sbr.rel (%p378) target = $region20
        $region19: #{tpu_custom_call.1} parent=11 // pred_region
          %s382 = ssub.s32 96, 96
          %383 = vsyncadd [#allocation12], %s382
          %s385 = sshll.u32 [#allocation11], 4
          %s386 = int_to_ptr.vmem [resolvable:$true] %s385
          %388 = dma.hbm_to_vmem [thread:$0]  %s5, 96, %s386, [#allocation12]
        $region20: #{tpu_custom_call.1} parent=11 // pred_fallthru
          _
        // Predicated region
        $region21: #{tpu_custom_call.1} parent=11 // pred_check
          %p389 = pneg %p219
        $region22: #{tpu_custom_call.1} parent=11 // pred_check_branch
          %391 = sbr.rel (%p389) target = $region24
        $region23: #{tpu_custom_call.1} parent=11 // pred_region
          %s393 = ssub.s32 16, 16
          %394 = vsyncadd [#allocation12], %s393
          %s396 = sshll.u32 [#allocation13], 4
          %s397 = int_to_ptr.vmem [resolvable:$true] %s396
          %399 = dma.hbm_to_vmem [thread:$0]  %s6, 16, %s397, [#allocation12]
        $region24: #{tpu_custom_call.1} parent=11 // pred_fallthru
          _
        // Predicated region
        $region25: #{tpu_custom_call.1} parent=11 // pred_check
          %p400 = pneg %p240
        $region26: #{tpu_custom_call.1} parent=11 // pred_check_branch
          %402 = sbr.rel (%p400) target = $region28
        $region27: #{tpu_custom_call.1} parent=11 // pred_region
          %s404 = ssub.s32 3072, 3072
          %405 = vsyncadd [#allocation15], %s404
          %s406 = sshll.u32 [#allocation14], 4
          %s407 = int_to_ptr.vmem [resolvable:$true] %s406
          %412 = dma.hbm_to_vmem [thread:$0]  %s7, 3072, %s407, [#allocation15], 192, 192, 12
        $region28: #{tpu_custom_call.1} parent=11 // pred_fallthru
          _
      $region12: #{tpu_custom_call.1} parent=5 // pred_fallthru
        _
      %p413 = scmp.lt.s32.totalorder %s38, 4
      // Predicated region
      $region29: #{tpu_custom_call.1} parent=5 // pred_check
        %p414 = pneg %p413
      $region30: #{tpu_custom_call.1} parent=5 // pred_check_branch
        %416 = sbr.rel (%p414) target = $region32
      $region31: #{tpu_custom_call.1} parent=5 // pred_region
        // Predicated region
        $region33: #{tpu_custom_call.1} parent=31 // pred_check
          %p417 = pneg %p70
        $region34: #{tpu_custom_call.1} parent=31 // pred_check_branch
          %419 = sbr.rel (%p417) target = $region36
        $region35: #{tpu_custom_call.1} parent=31 // pred_region
          %s420 = sand.u32 %s60, 1
          %s421 = scalar_lea.sflag [#allocation3], %s420
          %s422 = sand.u32 %s60, 1
          %s423 = scalar_lea.vmem [#allocation2], %s422
          %s425 = ssub.s32 16, 16
          %426 = vsyncadd %s421, %s425
          %s427 = smul.addr %s45, 16
          %s428 = scalar_lea.hbm %s0, %s427
          %s430 = sshll.u32 %s423, 4
          %s431 = int_to_ptr.vmem [resolvable:$true] %s430
          %433 = dma.hbm_to_vmem [thread:$0]  %s428, 16, %s431, %s421
        $region36: #{tpu_custom_call.1} parent=31 // pred_fallthru
          _
        // Predicated region
        $region37: #{tpu_custom_call.1} parent=31 // pred_check
          %p434 = pneg %p98
        $region38: #{tpu_custom_call.1} parent=31 // pred_check_branch
          %436 = sbr.rel (%p434) target = $region40
        $region39: #{tpu_custom_call.1} parent=31 // pred_region
          %s437 = sand.u32 %s38, 1
          %s438 = scalar_lea.sflag [#allocation6], %s437
          %s439 = sand.u32 %s88, 1
          %s440 = smul.addr %s439, 128
          %s441 = scalar_lea.vmem [#allocation5], %s440
          %s442 = smul.u32 16, %s46
          %s444 = ssub.s32 2048, 2048
          %445 = vsyncadd %s438, %s444
          %s446 = smul.addr %s45, 32
          %s447 = sadd.s32 %s442, %s446
          %s448 = smul.addr %s447, 128
          %s449 = scalar_lea.hbm %s1, %s448
          %s450 = sshll.u32 %s441, 4
          %s451 = int_to_ptr.vmem [resolvable:$true] %s450
          %456 = dma.hbm_to_vmem [thread:$0]  %s449, 2048, %s451, %s438, 128, 128, 8
        $region40: #{tpu_custom_call.1} parent=31 // pred_fallthru
          _
        // Predicated region
        $region41: #{tpu_custom_call.1} parent=31 // pred_check
          %p457 = pneg %p124
        $region42: #{tpu_custom_call.1} parent=31 // pred_check_branch
          %459 = sbr.rel (%p457) target = $region44
        $region43: #{tpu_custom_call.1} parent=31 // pred_region
          %s460 = sand.u32 %s38, 1
          %s461 = scalar_lea.sflag [#allocation6], %s460
          %s462 = sand.u32 %s114, 1
          %s463 = smul.addr %s462, 64
          %s464 = scalar_lea.vmem [#allocation7], %s463
          %s465 = smul.u32 16, %s46
          %s467 = ssub.s32 1024, 1024
          %468 = vsyncadd %s461, %s467
          %s469 = smul.addr %s465, 64
          %s470 = scalar_lea.hbm %s2, %s469
          %s471 = sshll.u32 %s464, 4
          %s472 = int_to_ptr.vmem [resolvable:$true] %s471
          %477 = dma.hbm_to_vmem [thread:$0]  %s470, 1024, %s472, %s461, 64, 64, 4
        $region44: #{tpu_custom_call.1} parent=31 // pred_fallthru
          _
        // Predicated region
        $region45: #{tpu_custom_call.1} parent=31 // pred_check
          %p478 = pneg %p150
        $region46: #{tpu_custom_call.1} parent=31 // pred_check_branch
          %480 = sbr.rel (%p478) target = $region48
        $region47: #{tpu_custom_call.1} parent=31 // pred_region
          %s481 = sand.u32 %s38, 1
          %s482 = scalar_lea.sflag [#allocation9], %s481
          %s483 = sand.u32 %s140, 1
          %s484 = smul.addr %s483, 64
          %s485 = scalar_lea.vmem [#allocation8], %s484
          %s486 = smul.u32 16, %s46
          %s488 = ssub.s32 1024, 1024
          %489 = vsyncadd %s482, %s488
          %s490 = smul.addr %s486, 64
          %s491 = scalar_lea.hbm %s3, %s490
          %s492 = sshll.u32 %s485, 4
          %s493 = int_to_ptr.vmem [resolvable:$true] %s492
          %498 = dma.hbm_to_vmem [thread:$0]  %s491, 1024, %s493, %s482, 64, 64, 4
        $region48: #{tpu_custom_call.1} parent=31 // pred_fallthru
          _
      $region32: #{tpu_custom_call.1} parent=5 // pred_fallthru
        _
      %p499 = scmp.le.s32.totalorder 1, %s38
      %p500 = scmp.lt.s32.totalorder %s38, 5
      %p501 = pnand %p499, %p500
      %p502 = pneg %p501
      // Predicated region
      $region49: #{tpu_custom_call.1} parent=5 // pred_check
        _
      $region50: #{tpu_custom_call.1} parent=5 // pred_check_branch
        %504 = sbr.rel (%p501) target = $region52
      $region51: #{tpu_custom_call.1} parent=5 // pred_region
        %s505 = ssub.s32 %s38, 1
        %s506 = sand.u32 %s63, 1
        %s507 = scalar_lea.sflag [#allocation3], %s506
        %s508 = sand.u32 %s63, 1
        %s509 = scalar_lea.vmem [#allocation2], %s508
        // Predicated region
        $region53: #{tpu_custom_call.1} parent=51 // pred_check
          %p510 = pneg %p76
        $region54: #{tpu_custom_call.1} parent=51 // pred_check_branch
          %512 = sbr.rel (%p510) target = $region56
        $region55: #{tpu_custom_call.1} parent=51 // pred_region
          %513 = dma.done %s507, 16
        $region56: #{tpu_custom_call.1} parent=51 // pred_fallthru
          _
        %s514 = sand.u32 %s43, 1
        %s515 = scalar_lea.sflag [#allocation6], %s514
        %s516 = sand.u32 %s91, 1
        %s517 = smul.addr %s516, 128
        %s518 = scalar_lea.vmem [#allocation5], %s517
        // Predicated region
        $region57: #{tpu_custom_call.1} parent=51 // pred_check
          %p519 = pneg %p104
        $region58: #{tpu_custom_call.1} parent=51 // pred_check_branch
          %521 = sbr.rel (%p519) target = $region60
        $region59: #{tpu_custom_call.1} parent=51 // pred_region
          %522 = dma.done %s515, 2048
        $region60: #{tpu_custom_call.1} parent=51 // pred_fallthru
          _
        %s523 = sand.u32 %s43, 1
        %s524 = scalar_lea.sflag [#allocation6], %s523
        %s525 = sand.u32 %s117, 1
        %s526 = smul.addr %s525, 64
        %s527 = scalar_lea.vmem [#allocation7], %s526
        // Predicated region
        $region61: #{tpu_custom_call.1} parent=51 // pred_check
          %p528 = pneg %p130
        $region62: #{tpu_custom_call.1} parent=51 // pred_check_branch
          %530 = sbr.rel (%p528) target = $region64
        $region63: #{tpu_custom_call.1} parent=51 // pred_region
          %531 = dma.done %s524, 1024
        $region64: #{tpu_custom_call.1} parent=51 // pred_fallthru
          _
        %s532 = sand.u32 %s43, 1
        %s533 = scalar_lea.sflag [#allocation9], %s532
        %s534 = sand.u32 %s143, 1
        %s535 = smul.addr %s534, 64
        %s536 = scalar_lea.vmem [#allocation8], %s535
        // Predicated region
        $region65: #{tpu_custom_call.1} parent=51 // pred_check
          %p537 = pneg %p156
        $region66: #{tpu_custom_call.1} parent=51 // pred_check_branch
          %539 = sbr.rel (%p537) target = $region68
        $region67: #{tpu_custom_call.1} parent=51 // pred_region
          %540 = dma.done %s533, 1024
        $region68: #{tpu_custom_call.1} parent=51 // pred_fallthru
          _
        // Predicated region
        $region69: #{tpu_custom_call.1} parent=51 // pred_check
          %p541 = pneg %p177
        $region70: #{tpu_custom_call.1} parent=51 // pred_check_branch
          %543 = sbr.rel (%p541) target = $region72
        $region71: #{tpu_custom_call.1} parent=51 // pred_region
          %544 = dma.done [#allocation9], 6144
        $region72: #{tpu_custom_call.1} parent=51 // pred_fallthru
          _
        // Predicated region
        $region73: #{tpu_custom_call.1} parent=51 // pred_check
          %p545 = pneg %p198
        $region74: #{tpu_custom_call.1} parent=51 // pred_check_branch
          %547 = sbr.rel (%p545) target = $region76
        $region75: #{tpu_custom_call.1} parent=51 // pred_region
          %548 = dma.done [#allocation12], 96
        $region76: #{tpu_custom_call.1} parent=51 // pred_fallthru
          _
        // Predicated region
        $region77: #{tpu_custom_call.1} parent=51 // pred_check
          %p549 = pneg %p219
        $region78: #{tpu_custom_call.1} parent=51 // pred_check_branch
          %551 = sbr.rel (%p549) target = $region80
        $region79: #{tpu_custom_call.1} parent=51 // pred_region
          %552 = dma.done [#allocation12], 16
        $region80: #{tpu_custom_call.1} parent=51 // pred_fallthru
          _
        // Predicated region
        $region81: #{tpu_custom_call.1} parent=51 // pred_check
          %p553 = pneg %p240
        $region82: #{tpu_custom_call.1} parent=51 // pred_check_branch
          %555 = sbr.rel (%p553) target = $region84
        $region83: #{tpu_custom_call.1} parent=51 // pred_region
          %556 = dma.done [#allocation15], 3072
        $region84: #{tpu_custom_call.1} parent=51 // pred_fallthru
          _
        %s557 = sand.u32 %s63, 1
        %s558 = scalar_lea.sflag [#allocation3], %s557
        %s559 = sand.u32 %s63, 1
        %s560 = scalar_lea.vmem [#allocation2], %s559
        %p561 = pneg %p76
        %p562 = pneg %p73
        %s563 = sand.u32 %s43, 1
        %s564 = scalar_lea.sflag [#allocation6], %s563
        %s565 = sand.u32 %s91, 1
        %s566 = smul.addr %s565, 128
        %s567 = scalar_lea.vmem [#allocation5], %s566
        %p568 = pneg %p104
        %p569 = pneg %p101
        %s570 = sand.u32 %s43, 1
        %s571 = scalar_lea.sflag [#allocation6], %s570
        %s572 = sand.u32 %s117, 1
        %s573 = smul.addr %s572, 64
        %s574 = scalar_lea.vmem [#allocation7], %s573
        %p575 = pneg %p130
        %p576 = pneg %p127
        %s577 = sand.u32 %s43, 1
        %s578 = scalar_lea.sflag [#allocation9], %s577
        %s579 = sand.u32 %s143, 1
        %s580 = smul.addr %s579, 64
        %s581 = scalar_lea.vmem [#allocation8], %s580
        %p582 = pneg %p156
        %p583 = pneg %p153
        %p584 = pneg %p177
        %p585 = pneg %p174
        %p586 = pneg %p198
        %p587 = pneg %p195
        %p588 = pneg %p219
        %p589 = pneg %p216
        %p590 = pneg %p240
        %p591 = pneg %p237
        %p592 = pneg %p266
        %p593 = pneg %p263
        %s594 = sand.u32 %s253, 1
        %s595 = scalar_lea.sflag [#allocation4], %s594
        %s596 = sand.u32 %s253, 1
        %s597 = smul.addr %s596, 6
        %s598 = scalar_lea.vmem [#allocation16], %s597
        %p599 = pneg %p294
        %p600 = pneg %p291
        %s601 = sand.u32 %s43, 1
        %s602 = scalar_lea.sflag [#allocation18], %s601
        %s603 = sand.u32 %s281, 1
        %s604 = smul.addr %s603, 128
        %s605 = scalar_lea.vmem [#allocation17], %s604
        %p606 = pneg %p322
        %p607 = pneg %p319
        %s608 = sand.u32 %s43, 1
        %s609 = scalar_lea.sflag [#allocation18], %s608
        %s610 = sand.u32 %s309, 1
        %s611 = smul.addr %s610, 64
        %s612 = scalar_lea.vmem [#allocation19], %s611
        %p613 = pneg %p350
        %p614 = pneg %p347
        %s615 = sand.u32 %s337, 1
        %s616 = scalar_lea.sflag [#allocation21], %s615
        %s617 = sand.u32 %s337, 1
        %s618 = smul.addr %s617, 128
        %s619 = scalar_lea.vmem [#allocation20], %s618
        %s620 = smul.u32 16, %s48
        %s621 = smul.u32 16, %s48
        %s622 = smul.u32 16, %s48
        %s623 = smul.u32 16, %s48
        %s624 = smul.u32 16, %s48
        %p626 = scmp.eq.s32.totalorder %s48, 0
        // Predicated region
        $region85: #{tpu_custom_call.1} parent=51 // pred_check
          %p627 = pneg %p626
        $region86: #{tpu_custom_call.1} parent=51 // pred_check_branch
          %629 = sbr.rel (%p627) target = $region88
        $region87: #{tpu_custom_call.1} parent=51 // pred_region
          %v630 = vld [vmem:[%s509] sm:$0x1]
          %v631 = vld [vmem:[#allocation10] sm:$0xff]
          %v632 = vld [vmem:[#allocation10 + $0x8] sm:$0xff]
          %v633 = vld [vmem:[#allocation10 + $0x10] sm:$0xff]
          %v634 = vld [vmem:[#allocation10 + $0x18] sm:$0xff]
          %v635 = vld [vmem:[#allocation10 + $0x20] sm:$0xff]
          %v636 = vld [vmem:[#allocation10 + $0x28] sm:$0xff]
          %v637 = vld [vmem:[#allocation10 + $0x30] sm:$0xff]
          %v638 = vld [vmem:[#allocation10 + $0x38] sm:$0xff]
          %v639 = vld [vmem:[#allocation10 + $0x40] sm:$0xff]
          %v640 = vld [vmem:[#allocation10 + $0x48] sm:$0xff]
          %v641 = vld [vmem:[#allocation10 + $0x50] sm:$0xff]
          %v642 = vld [vmem:[#allocation10 + $0x58] sm:$0xff]
          %v643 = vld [vmem:[#allocation10 + $0x60] sm:$0xff]
          %v644 = vld [vmem:[#allocation10 + $0x68] sm:$0xff]
          %v645 = vld [vmem:[#allocation10 + $0x70] sm:$0xff]
          %v646 = vld [vmem:[#allocation10 + $0x78] sm:$0xff]
          %v647 = vld [vmem:[#allocation10 + $0x80] sm:$0xff]
          %v648 = vld [vmem:[#allocation10 + $0x88] sm:$0xff]
          %v649 = vld [vmem:[#allocation10 + $0x90] sm:$0xff]
          %v650 = vld [vmem:[#allocation10 + $0x98] sm:$0xff]
          %v651 = vld [vmem:[#allocation10 + $0xa0] sm:$0xff]
          %v652 = vld [vmem:[#allocation10 + $0xa8] sm:$0xff]
          %v653 = vld [vmem:[#allocation10 + $0xb0] sm:$0xff]
          %v654 = vld [vmem:[#allocation10 + $0xb8] sm:$0xff]
          %v655 = vld [vmem:[#allocation10 + $0xc0] sm:$0xff]
          %v656 = vld [vmem:[#allocation10 + $0xc8] sm:$0xff]
          %v657 = vld [vmem:[#allocation10 + $0xd0] sm:$0xff]
          %v658 = vld [vmem:[#allocation10 + $0xd8] sm:$0xff]
          %v659 = vld [vmem:[#allocation10 + $0xe0] sm:$0xff]
          %v660 = vld [vmem:[#allocation10 + $0xe8] sm:$0xff]
          %v661 = vld [vmem:[#allocation10 + $0xf0] sm:$0xff]
          %v662 = vld [vmem:[#allocation10 + $0xf8] sm:$0xff]
          %v663 = vld [vmem:[#allocation10 + $0x100] sm:$0xff]
          %v664 = vld [vmem:[#allocation10 + $0x108] sm:$0xff]
          %v665 = vld [vmem:[#allocation10 + $0x110] sm:$0xff]
          %v666 = vld [vmem:[#allocation10 + $0x118] sm:$0xff]
          %v667 = vld [vmem:[#allocation10 + $0x120] sm:$0xff]
          %v668 = vld [vmem:[#allocation10 + $0x128] sm:$0xff]
          %v669 = vld [vmem:[#allocation10 + $0x130] sm:$0xff]
          %v670 = vld [vmem:[#allocation10 + $0x138] sm:$0xff]
          %v671 = vld [vmem:[#allocation10 + $0x140] sm:$0xff]
          %v672 = vld [vmem:[#allocation10 + $0x148] sm:$0xff]
          %v673 = vld [vmem:[#allocation10 + $0x150] sm:$0xff]
          %v674 = vld [vmem:[#allocation10 + $0x158] sm:$0xff]
          %v675 = vld [vmem:[#allocation10 + $0x160] sm:$0xff]
          %v676 = vld [vmem:[#allocation10 + $0x168] sm:$0xff]
          %v677 = vld [vmem:[#allocation10 + $0x170] sm:$0xff]
          %v678 = vld [vmem:[#allocation10 + $0x178] sm:$0xff]
          %v679 = vld [vmem:[#allocation11] sm:$0x3f]
          %v681 = vlaneseq
          %v682 = vshrl.u32 %v681, 7
          %v683 = vsub.s32 0, %v682
          %v684 = vrot.slane %v679, %v683
          %v685 = vlaneseq
          %v686 = vshrl.u32 %v685, 7
          %v687 = vsub.s32 1, %v686
          %v688 = vrot.slane %v679, %v687
          %v689 = vlaneseq
          %v690 = vshrl.u32 %v689, 7
          %v691 = vsub.s32 2, %v690
          %v692 = vrot.slane %v679, %v691
          %v693 = vlaneseq
          %v694 = vshrl.u32 %v693, 7
          %v695 = vsub.s32 3, %v694
          %v696 = vrot.slane %v679, %v695
          %v697 = vlaneseq
          %v698 = vshrl.u32 %v697, 7
          %v699 = vsub.s32 4, %v698
          %v700 = vrot.slane %v679, %v699
          %v701 = vlaneseq
          %v702 = vshrl.u32 %v701, 7
          %v703 = vsub.s32 5, %v702
          %v704 = vrot.slane %v679, %v703
          %vm711 = vcmask 523264
          %v713 = vsel %vm711, %v630, 0
          %715 = vmatprep.subr.mxu0 %v632
          %716 = vmatpush1.msra.mxu0 %v631
          %717 = vmatprep.subr.mxu0 %v638
          %718 = vmatpush1.msra.mxu0 %v637
          %719 = vmatprep.subr.mxu0 %v644
          %720 = vmatpush1.msra.mxu0 %v643
          %721 = vmatprep.subr.mxu0 %v650
          %722 = vmatpush1.msra.mxu0 %v649
          %723 = vmatprep.subr.mxu0 %v656
          %724 = vmatpush1.msra.mxu0 %v655
          %725 = vmatprep.subr.mxu0 %v662
          %726 = vmatpush1.msra.mxu0 %v661
          %727 = vmatprep.subr.mxu0 %v668
          %728 = vmatpush1.msra.mxu0 %v667
          %729 = vmatprep.subr.mxu0 %v674
          %730 = vmatpush1.msra.mxu0 %v673
          %731 = vmatprep.subr.mxu0 0.0
          %732 = vmatpush1.msra.mxu0 0.0
          %733 = vmatprep.subr.mxu0 0.0
          %734 = vmatpush1.msra.mxu0 0.0
          %735 = vmatprep.subr.mxu0 0.0
          %736 = vmatpush1.msra.mxu0 0.0
          %737 = vmatprep.subr.mxu0 0.0
          %738 = vmatpush1.msra.mxu0 0.0
          %739 = vmatprep.subr.mxu0 0.0
          %740 = vmatpush1.msra.mxu0 0.0
          %741 = vmatprep.subr.mxu0 0.0
          %742 = vmatpush1.msra.mxu0 0.0
          %743 = vmatprep.subr.mxu0 0.0
          %744 = vmatpush1.msra.mxu0 0.0
          %745 = vmatprep.subr.mxu0 0.0
          %746 = vmatpush1.msra.mxu0 0.0
          %747 = vmatprep.subr.mxu0 0.0
          %748 = vmatpush1.msra.mxu0 0.0
          %749 = vmatprep.subr.mxu0 0.0
          %750 = vmatpush1.msra.mxu0 0.0
          %751 = vmatprep.subr.mxu0 0.0
          %752 = vmatpush1.msra.mxu0 0.0
          %753 = vmatprep.subr.mxu0 0.0
          %754 = vmatpush1.msra.mxu0 0.0
          %755 = vmatprep.subr.mxu0 0.0
          %756 = vmatpush1.msra.mxu0 0.0
          %757 = vmatprep.subr.mxu0 0.0
          %758 = vmatpush1.msra.mxu0 0.0
          %759 = vmatprep.subr.mxu0 0.0
          %760 = vmatpush1.msra.mxu0 0.0
          %761 = vmatprep.subr.mxu0 0.0
          %762 = vmatpush1.msra.mxu0 0.0
          %763 = vmatprep.subr.mxu0 0.0
          %764 = vmatpush1.msra.mxu0 0.0
          %765 = vmatprep.subr.mxu0 0.0
          %766 = vmatpush1.msra.mxu0 0.0
          %767 = vmatprep.subr.mxu0 0.0
          %768 = vmatpush1.msra.mxu0 0.0
          %769 = vmatprep.subr.mxu0 0.0
          %770 = vmatpush1.msra.mxu0 0.0
          %771 = vmatprep.subr.mxu0 0.0
          %772 = vmatpush1.msra.mxu0 0.0
          %773 = vmatprep.subr.mxu0 0.0
          %774 = vmatpush1.msra.mxu0 0.0
          %775 = vmatprep.subr.mxu0 0.0
          %776 = vmatpush1.msra.mxu0 0.0
          %777 = vmatprep.subr.mxu0 0.0
          %778 = vmatpush1.msra.mxu0 0.0
          %779 = vmatprep.mubr.f32.mxu0 0.0
          %780 = vmatmul.mubr.f32.gmra.mrb[0].mxu0 %v713
          %v781 = vpop.f32.mrb[0].mxu0
          %v782 = vadd.f32 %v684, %v781
          %v783 = vpop.f32.mrb[0].mxu0
          %v784 = vadd.f32 %v688, %v783
          %785 = vdwg.mxu0
          %786 = vmatprep.subr.mxu0 %v634
          %787 = vmatpush1.msra.mxu0 %v633
          %788 = vmatprep.subr.mxu0 %v640
          %789 = vmatpush1.msra.mxu0 %v639
          %790 = vmatprep.subr.mxu0 %v646
          %791 = vmatpush1.msra.mxu0 %v645
          %792 = vmatprep.subr.mxu0 %v652
          %793 = vmatpush1.msra.mxu0 %v651
          %794 = vmatprep.subr.mxu0 %v658
          %795 = vmatpush1.msra.mxu0 %v657
          %796 = vmatprep.subr.mxu0 %v664
          %797 = vmatpush1.msra.mxu0 %v663
          %798 = vmatprep.subr.mxu0 %v670
          %799 = vmatpush1.msra.mxu0 %v669
          %800 = vmatprep.subr.mxu0 %v676
          %801 = vmatpush1.msra.mxu0 %v675
          %802 = vmatprep.subr.mxu0 0.0
          %803 = vmatpush1.msra.mxu0 0.0
          %804 = vmatprep.subr.mxu0 0.0
          %805 = vmatpush1.msra.mxu0 0.0
          %806 = vmatprep.subr.mxu0 0.0
          %807 = vmatpush1.msra.mxu0 0.0
          %808 = vmatprep.subr.mxu0 0.0
          %809 = vmatpush1.msra.mxu0 0.0
          %810 = vmatprep.subr.mxu0 0.0
          %811 = vmatpush1.msra.mxu0 0.0
          %812 = vmatprep.subr.mxu0 0.0
          %813 = vmatpush1.msra.mxu0 0.0
          %814 = vmatprep.subr.mxu0 0.0
          %815 = vmatpush1.msra.mxu0 0.0
          %816 = vmatprep.subr.mxu0 0.0
          %817 = vmatpush1.msra.mxu0 0.0
          %818 = vmatprep.subr.mxu0 0.0
          %819 = vmatpush1.msra.mxu0 0.0
          %820 = vmatprep.subr.mxu0 0.0
          %821 = vmatpush1.msra.mxu0 0.0
          %822 = vmatprep.subr.mxu0 0.0
          %823 = vmatpush1.msra.mxu0 0.0
          %824 = vmatprep.subr.mxu0 0.0
          %825 = vmatpush1.msra.mxu0 0.0
          %826 = vmatprep.subr.mxu0 0.0
          %827 = vmatpush1.msra.mxu0 0.0
          %828 = vmatprep.subr.mxu0 0.0
          %829 = vmatpush1.msra.mxu0 0.0
          %830 = vmatprep.subr.mxu0 0.0
          %831 = vmatpush1.msra.mxu0 0.0
          %832 = vmatprep.subr.mxu0 0.0
          %833 = vmatpush1.msra.mxu0 0.0
          %834 = vmatprep.subr.mxu0 0.0
          %835 = vmatpush1.msra.mxu0 0.0
          %836 = vmatprep.subr.mxu0 0.0
          %837 = vmatpush1.msra.mxu0 0.0
          %838 = vmatprep.subr.mxu0 0.0
          %839 = vmatpush1.msra.mxu0 0.0
          %840 = vmatprep.subr.mxu0 0.0
          %841 = vmatpush1.msra.mxu0 0.0
          %842 = vmatprep.subr.mxu0 0.0
          %843 = vmatpush1.msra.mxu0 0.0
          %844 = vmatprep.subr.mxu0 0.0
          %845 = vmatpush1.msra.mxu0 0.0
          %846 = vmatprep.subr.mxu0 0.0
          %847 = vmatpush1.msra.mxu0 0.0
          %848 = vmatprep.subr.mxu0 0.0
          %849 = vmatpush1.msra.mxu0 0.0
          %850 = vmatprep.mubr.f32.mxu0 0.0
          %851 = vmatmul.mubr.f32.gmra.mrb[0].mxu0 %v713
          %v852 = vpop.f32.mrb[0].mxu0
          %v853 = vadd.f32 %v692, %v852
          %v854 = vpop.f32.mrb[0].mxu0
          %v855 = vadd.f32 %v696, %v854
          %856 = vdwg.mxu0
          %857 = vmatprep.subr.mxu0 %v636
          %858 = vmatpush1.msra.mxu0 %v635
          %859 = vmatprep.subr.mxu0 %v642
          %860 = vmatpush1.msra.mxu0 %v641
          %861 = vmatprep.subr.mxu0 %v648
          %862 = vmatpush1.msra.mxu0 %v647
          %863 = vmatprep.subr.mxu0 %v654
          %864 = vmatpush1.msra.mxu0 %v653
          %865 = vmatprep.subr.mxu0 %v660
          %866 = vmatpush1.msra.mxu0 %v659
          %867 = vmatprep.subr.mxu0 %v666
          %868 = vmatpush1.msra.mxu0 %v665
          %869 = vmatprep.subr.mxu0 %v672
          %870 = vmatpush1.msra.mxu0 %v671
          %871 = vmatprep.subr.mxu0 %v678
          %872 = vmatpush1.msra.mxu0 %v677
          %873 = vmatprep.subr.mxu0 0.0
          %874 = vmatpush1.msra.mxu0 0.0
          %875 = vmatprep.subr.mxu0 0.0
          %876 = vmatpush1.msra.mxu0 0.0
          %877 = vmatprep.subr.mxu0 0.0
          %878 = vmatpush1.msra.mxu0 0.0
          %879 = vmatprep.subr.mxu0 0.0
          %880 = vmatpush1.msra.mxu0 0.0
          %881 = vmatprep.subr.mxu0 0.0
          %882 = vmatpush1.msra.mxu0 0.0
          %883 = vmatprep.subr.mxu0 0.0
          %884 = vmatpush1.msra.mxu0 0.0
          %885 = vmatprep.subr.mxu0 0.0
          %886 = vmatpush1.msra.mxu0 0.0
          %887 = vmatprep.subr.mxu0 0.0
          %888 = vmatpush1.msra.mxu0 0.0
          %889 = vmatprep.subr.mxu0 0.0
          %890 = vmatpush1.msra.mxu0 0.0
          %891 = vmatprep.subr.mxu0 0.0
          %892 = vmatpush1.msra.mxu0 0.0
          %893 = vmatprep.subr.mxu0 0.0
          %894 = vmatpush1.msra.mxu0 0.0
          %895 = vmatprep.subr.mxu0 0.0
          %896 = vmatpush1.msra.mxu0 0.0
          %897 = vmatprep.subr.mxu0 0.0
          %898 = vmatpush1.msra.mxu0 0.0
          %899 = vmatprep.subr.mxu0 0.0
          %900 = vmatpush1.msra.mxu0 0.0
          %901 = vmatprep.subr.mxu0 0.0
          %902 = vmatpush1.msra.mxu0 0.0
          %903 = vmatprep.subr.mxu0 0.0
          %904 = vmatpush1.msra.mxu0 0.0
          %905 = vmatprep.subr.mxu0 0.0
          %906 = vmatpush1.msra.mxu0 0.0
          %907 = vmatprep.subr.mxu0 0.0
          %908 = vmatpush1.msra.mxu0 0.0
          %909 = vmatprep.subr.mxu0 0.0
          %910 = vmatpush1.msra.mxu0 0.0
          %911 = vmatprep.subr.mxu0 0.0
          %912 = vmatpush1.msra.mxu0 0.0
          %913 = vmatprep.subr.mxu0 0.0
          %914 = vmatpush1.msra.mxu0 0.0
          %915 = vmatprep.subr.mxu0 0.0
          %916 = vmatpush1.msra.mxu0 0.0
          %917 = vmatprep.subr.mxu0 0.0
          %918 = vmatpush1.msra.mxu0 0.0
          %919 = vmatprep.subr.mxu0 0.0
          %920 = vmatpush1.msra.mxu0 0.0
          %921 = vmatprep.mubr.f32.mxu0 0.0
          %922 = vmatmul.mubr.f32.gmra.mrb[0].mxu0 %v713
          %v923 = vpop.f32.mrb[0].mxu0
          %v924 = vadd.f32 %v700, %v923
          %v925 = vpop.f32.mrb[0].mxu0
          %v926 = vadd.f32 %v704, %v925
          %927 = vdwg.mxu0
          %v934 = vcombine.low %v782, %v784
          %v935 = vcombine.low %v853, %v855
          %v936 = vcombine.low %v924, %v926
          %v938 = vunpack.c.l.s4 1966171168
          %v939 = vunpack.c.0.s8 %v938
          %v940 = vlaneseq
          %v941 = vshrl.u32 %v940, 7
          %v942 = vsub.s32 %v939, %v941
          %v943 = vrot.slane %v934, %v942
          %v945 = vunpack.c.l.s4 1966171168
          %v946 = vunpack.c.0.s8 %v945
          %v947 = vlaneseq
          %v948 = vshrl.u32 %v947, 7
          %v949 = vsub.s32 %v946, %v948
          %v950 = vrot.slane %v935, %v949
          %v952 = vunpack.c.l.s4 1966171168
          %v953 = vunpack.c.0.s8 %v952
          %v954 = vlaneseq
          %v955 = vshrl.u32 %v954, 7
          %v956 = vsub.s32 %v953, %v955
          %v957 = vrot.slane %v936, %v956
          %v958 = vcombine.low %v943, %v950
          %v960 = vunpack.c.l.s4 1966171168
          %v961 = vunpack.c.0.s8 %v960
          %v962 = vlaneseq
          %v963 = vshrl.u32 %v962, 7
          %v964 = vsub.s32 %v961, %v963
          %v965 = vrot.slane %v958, %v964
          %v967 = vunpack.c.l.s4 1966171168
          %v968 = vunpack.c.0.s8 %v967
          %v969 = vlaneseq
          %v970 = vshrl.u32 %v969, 7
          %v971 = vsub.s32 %v968, %v970
          %v972 = vrot.slane %v957, %v971
          %v973 = vcombine.low %v965, %v972
          %v975 = vlaneseq
          %vm976 = vcmp.ge.s32.totalorder %v975, 0
          %vm977 = vcmp.lt.s32.totalorder %v975, 768
          %vm978 = vmand %vm976, %vm977
          %979 = vst.msk [vmem:[%s598] sm:$0x3f] %vm978, %v973
        $region88: #{tpu_custom_call.1} parent=51 // pred_fallthru
          _
        %v980 = vld [vmem:[%s598] sm:$0x3f]
        %v981 = vld [vmem:[%s518] sm:$0xff]
        %v982 = vld [vmem:[%s518 + $0x8] sm:$0xff]
        %v983 = vld [vmem:[%s518 + $0x10] sm:$0xff]
        %v984 = vld [vmem:[%s518 + $0x18] sm:$0xff]
        %v985 = vld [vmem:[%s518 + $0x20] sm:$0xff]
        %v986 = vld [vmem:[%s518 + $0x28] sm:$0xff]
        %v987 = vld [vmem:[%s518 + $0x30] sm:$0xff]
        %v988 = vld [vmem:[%s518 + $0x38] sm:$0xff]
        %v989 = vld [vmem:[%s518 + $0x40] sm:$0xff]
        %v990 = vld [vmem:[%s518 + $0x48] sm:$0xff]
        %v991 = vld [vmem:[%s518 + $0x50] sm:$0xff]
        %v992 = vld [vmem:[%s518 + $0x58] sm:$0xff]
        %v993 = vld [vmem:[%s518 + $0x60] sm:$0xff]
        %v994 = vld [vmem:[%s518 + $0x68] sm:$0xff]
        %v995 = vld [vmem:[%s518 + $0x70] sm:$0xff]
        %v996 = vld [vmem:[%s518 + $0x78] sm:$0xff]
        %v997 = vld [vmem:[#allocation13] sm:$0x1]
        %998 = vadd.xlane.f32.xlu0 %v981
        %v999 = vpop.xlane.xlu0 %998
        %1000 = vadd.xlane.f32.xlu0 %v982
        %v1001 = vpop.xlane.xlu0 %1000
        %1002 = vadd.xlane.f32.xlu0 %v983
        %v1003 = vpop.xlane.xlu0 %1002
        %1004 = vadd.xlane.f32.xlu0 %v984
        %v1005 = vpop.xlane.xlu0 %1004
        %1006 = vadd.xlane.f32.xlu0 %v985
        %v1007 = vpop.xlane.xlu0 %1006
        %1008 = vadd.xlane.f32.xlu0 %v986
        %v1009 = vpop.xlane.xlu0 %1008
        %1010 = vadd.xlane.f32.xlu0 %v987
        %v1011 = vpop.xlane.xlu0 %1010
        %1012 = vadd.xlane.f32.xlu0 %v988
        %v1013 = vpop.xlane.xlu0 %1012
        %1014 = vadd.xlane.f32.xlu0 %v989
        %v1015 = vpop.xlane.xlu0 %1014
        %1016 = vadd.xlane.f32.xlu0 %v990
        %v1017 = vpop.xlane.xlu0 %1016
        %1018 = vadd.xlane.f32.xlu0 %v991
        %v1019 = vpop.xlane.xlu0 %1018
        %1020 = vadd.xlane.f32.xlu0 %v992
        %v1021 = vpop.xlane.xlu0 %1020
        %1022 = vadd.xlane.f32.xlu0 %v993
        %v1023 = vpop.xlane.xlu0 %1022
        %1024 = vadd.xlane.f32.xlu0 %v994
        %v1025 = vpop.xlane.xlu0 %1024
        %1026 = vadd.xlane.f32.xlu0 %v995
        %v1027 = vpop.xlane.xlu0 %1026
        %1028 = vadd.xlane.f32.xlu0 %v996
        %v1029 = vpop.xlane.xlu0 %1028
        %v1030 = vrcp.pop 128.0
        %v1031 = vmul.f32 %v999, %v1030
        %v1032 = vmul.f32 %v1001, %v1030
        %v1033 = vmul.f32 %v1003, %v1030
        %v1034 = vmul.f32 %v1005, %v1030
        %v1035 = vmul.f32 %v1007, %v1030
        %v1036 = vmul.f32 %v1009, %v1030
        %v1037 = vmul.f32 %v1011, %v1030
        %v1038 = vmul.f32 %v1013, %v1030
        %v1039 = vmul.f32 %v1015, %v1030
        %v1040 = vmul.f32 %v1017, %v1030
        %v1041 = vmul.f32 %v1019, %v1030
        %v1042 = vmul.f32 %v1021, %v1030
        %v1043 = vmul.f32 %v1023, %v1030
        %v1044 = vmul.f32 %v1025, %v1030
        %v1045 = vmul.f32 %v1027, %v1030
        %v1046 = vmul.f32 %v1029, %v1030
        %v1047 = vsub.f32 %v981, %v1031
        %v1048 = vsub.f32 %v982, %v1032
        %v1049 = vsub.f32 %v983, %v1033
        %v1050 = vsub.f32 %v984, %v1034
        %v1051 = vsub.f32 %v985, %v1035
        %v1052 = vsub.f32 %v986, %v1036
        %v1053 = vsub.f32 %v987, %v1037
        %v1054 = vsub.f32 %v988, %v1038
        %v1055 = vsub.f32 %v989, %v1039
        %v1056 = vsub.f32 %v990, %v1040
        %v1057 = vsub.f32 %v991, %v1041
        %v1058 = vsub.f32 %v992, %v1042
        %v1059 = vsub.f32 %v993, %v1043
        %v1060 = vsub.f32 %v994, %v1044
        %v1061 = vsub.f32 %v995, %v1045
        %v1062 = vsub.f32 %v996, %v1046
        %v1063 = vmul.f32 %v1047, %v1047
        %v1064 = vmul.f32 %v1048, %v1048
        %v1065 = vmul.f32 %v1049, %v1049
        %v1066 = vmul.f32 %v1050, %v1050
        %v1067 = vmul.f32 %v1051, %v1051
        %v1068 = vmul.f32 %v1052, %v1052
        %v1069 = vmul.f32 %v1053, %v1053
        %v1070 = vmul.f32 %v1054, %v1054
        %v1071 = vmul.f32 %v1055, %v1055
        %v1072 = vmul.f32 %v1056, %v1056
        %v1073 = vmul.f32 %v1057, %v1057
        %v1074 = vmul.f32 %v1058, %v1058
        %v1075 = vmul.f32 %v1059, %v1059
        %v1076 = vmul.f32 %v1060, %v1060
        %v1077 = vmul.f32 %v1061, %v1061
        %v1078 = vmul.f32 %v1062, %v1062
        %1079 = vadd.xlane.f32.xlu0 %v1063
        %v1080 = vpop.xlane.xlu0 %1079
        %1081 = vadd.xlane.f32.xlu0 %v1064
        %v1082 = vpop.xlane.xlu0 %1081
        %1083 = vadd.xlane.f32.xlu0 %v1065
        %v1084 = vpop.xlane.xlu0 %1083
        %1085 = vadd.xlane.f32.xlu0 %v1066
        %v1086 = vpop.xlane.xlu0 %1085
        %1087 = vadd.xlane.f32.xlu0 %v1067
        %v1088 = vpop.xlane.xlu0 %1087
        %1089 = vadd.xlane.f32.xlu0 %v1068
        %v1090 = vpop.xlane.xlu0 %1089
        %1091 = vadd.xlane.f32.xlu0 %v1069
        %v1092 = vpop.xlane.xlu0 %1091
        %1093 = vadd.xlane.f32.xlu0 %v1070
        %v1094 = vpop.xlane.xlu0 %1093
        %1095 = vadd.xlane.f32.xlu0 %v1071
        %v1096 = vpop.xlane.xlu0 %1095
        %1097 = vadd.xlane.f32.xlu0 %v1072
        %v1098 = vpop.xlane.xlu0 %1097
        %1099 = vadd.xlane.f32.xlu0 %v1073
        %v1100 = vpop.xlane.xlu0 %1099
        %1101 = vadd.xlane.f32.xlu0 %v1074
        %v1102 = vpop.xlane.xlu0 %1101
        %1103 = vadd.xlane.f32.xlu0 %v1075
        %v1104 = vpop.xlane.xlu0 %1103
        %1105 = vadd.xlane.f32.xlu0 %v1076
        %v1106 = vpop.xlane.xlu0 %1105
        %1107 = vadd.xlane.f32.xlu0 %v1077
        %v1108 = vpop.xlane.xlu0 %1107
        %1109 = vadd.xlane.f32.xlu0 %v1078
        %v1110 = vpop.xlane.xlu0 %1109
        %v1111 = vmul.f32 %v1080, %v1030
        %v1112 = vmul.f32 %v1082, %v1030
        %v1113 = vmul.f32 %v1084, %v1030
        %v1114 = vmul.f32 %v1086, %v1030
        %v1115 = vmul.f32 %v1088, %v1030
        %v1116 = vmul.f32 %v1090, %v1030
        %v1117 = vmul.f32 %v1092, %v1030
        %v1118 = vmul.f32 %v1094, %v1030
        %v1119 = vmul.f32 %v1096, %v1030
        %v1120 = vmul.f32 %v1098, %v1030
        %v1121 = vmul.f32 %v1100, %v1030
        %v1122 = vmul.f32 %v1102, %v1030
        %v1123 = vmul.f32 %v1104, %v1030
        %v1124 = vmul.f32 %v1106, %v1030
        %v1125 = vmul.f32 %v1108, %v1030
        %v1126 = vmul.f32 %v1110, %v1030
        %v1127 = vadd.f32 %v1111, 1e-05
        %v1128 = vadd.f32 %v1112, 1e-05
        %v1129 = vadd.f32 %v1113, 1e-05
        %v1130 = vadd.f32 %v1114, 1e-05
        %v1131 = vadd.f32 %v1115, 1e-05
        %v1132 = vadd.f32 %v1116, 1e-05
        %v1133 = vadd.f32 %v1117, 1e-05
        %v1134 = vadd.f32 %v1118, 1e-05
        %v1135 = vadd.f32 %v1119, 1e-05
        %v1136 = vadd.f32 %v1120, 1e-05
        %v1137 = vadd.f32 %v1121, 1e-05
        %v1138 = vadd.f32 %v1122, 1e-05
        %v1139 = vadd.f32 %v1123, 1e-05
        %v1140 = vadd.f32 %v1124, 1e-05
        %v1141 = vadd.f32 %v1125, 1e-05
        %v1142 = vadd.f32 %v1126, 1e-05
        %v1143 = vrsqrt.pop %v1127
        %v1144 = vrsqrt.pop %v1128
        %v1145 = vrsqrt.pop %v1129
        %v1146 = vrsqrt.pop %v1130
        %v1147 = vrsqrt.pop %v1131
        %v1148 = vrsqrt.pop %v1132
        %v1149 = vrsqrt.pop %v1133
        %v1150 = vrsqrt.pop %v1134
        %v1151 = vrsqrt.pop %v1135
        %v1152 = vrsqrt.pop %v1136
        %v1153 = vrsqrt.pop %v1137
        %v1154 = vrsqrt.pop %v1138
        %v1155 = vrsqrt.pop %v1139
        %v1156 = vrsqrt.pop %v1140
        %v1157 = vrsqrt.pop %v1141
        %v1158 = vrsqrt.pop %v1142
        %v1159 = vmul.f32 %v1047, %v1143
        %v1160 = vmul.f32 %v1048, %v1144
        %v1161 = vmul.f32 %v1049, %v1145
        %v1162 = vmul.f32 %v1050, %v1146
        %v1163 = vmul.f32 %v1051, %v1147
        %v1164 = vmul.f32 %v1052, %v1148
        %v1165 = vmul.f32 %v1053, %v1149
        %v1166 = vmul.f32 %v1054, %v1150
        %v1167 = vmul.f32 %v1055, %v1151
        %v1168 = vmul.f32 %v1056, %v1152
        %v1169 = vmul.f32 %v1057, %v1153
        %v1170 = vmul.f32 %v1058, %v1154
        %v1171 = vmul.f32 %v1059, %v1155
        %v1172 = vmul.f32 %v1060, %v1156
        %v1173 = vmul.f32 %v1061, %v1157
        %v1174 = vmul.f32 %v1062, %v1158
        %v1176 = vlaneseq
        %v1177 = vshrl.u32 %v1176, 7
        %v1178 = vsub.s32 0, %v1177
        %v1179 = vrot.slane %v997, %v1178
        %v1181 = vmul.f32 %v1159, %v1179
        %v1182 = vmul.f32 %v1160, %v1179
        %v1183 = vmul.f32 %v1161, %v1179
        %v1184 = vmul.f32 %v1162, %v1179
        %v1185 = vmul.f32 %v1163, %v1179
        %v1186 = vmul.f32 %v1164, %v1179
        %v1187 = vmul.f32 %v1165, %v1179
        %v1188 = vmul.f32 %v1166, %v1179
        %v1189 = vmul.f32 %v1167, %v1179
        %v1190 = vmul.f32 %v1168, %v1179
        %v1191 = vmul.f32 %v1169, %v1179
        %v1192 = vmul.f32 %v1170, %v1179
        %v1193 = vmul.f32 %v1171, %v1179
        %v1194 = vmul.f32 %v1172, %v1179
        %v1195 = vmul.f32 %v1173, %v1179
        %v1196 = vmul.f32 %v1174, %v1179
        %v1198 = vrot.slane %v980, 1
        %v1200 = vadd.f32 %v1198, 1.0
        %v1202 = vlaneseq
        %v1203 = vshrl.u32 %v1202, 7
        %v1204 = vsub.s32 0, %v1203
        %v1205 = vrot.slane %v1200, %v1204
        %v1207 = vmul.f32 %v1181, %v1205
        %v1208 = vmul.f32 %v1182, %v1205
        %v1209 = vmul.f32 %v1183, %v1205
        %v1210 = vmul.f32 %v1184, %v1205
        %v1211 = vmul.f32 %v1185, %v1205
        %v1212 = vmul.f32 %v1186, %v1205
        %v1213 = vmul.f32 %v1187, %v1205
        %v1214 = vmul.f32 %v1188, %v1205
        %v1215 = vmul.f32 %v1189, %v1205
        %v1216 = vmul.f32 %v1190, %v1205
        %v1217 = vmul.f32 %v1191, %v1205
        %v1218 = vmul.f32 %v1192, %v1205
        %v1219 = vmul.f32 %v1193, %v1205
        %v1220 = vmul.f32 %v1194, %v1205
        %v1221 = vmul.f32 %v1195, %v1205
        %v1222 = vmul.f32 %v1196, %v1205
        %v1223 = vlaneseq
        %v1224 = vshrl.u32 %v1223, 7
        %v1225 = vsub.s32 0, %v1224
        %v1226 = vrot.slane %v980, %v1225
        %v1228 = vadd.f32 %v1207, %v1226
        %v1229 = vadd.f32 %v1208, %v1226
        %v1230 = vadd.f32 %v1209, %v1226
        %v1231 = vadd.f32 %v1210, %v1226
        %v1232 = vadd.f32 %v1211, %v1226
        %v1233 = vadd.f32 %v1212, %v1226
        %v1234 = vadd.f32 %v1213, %v1226
        %v1235 = vadd.f32 %v1214, %v1226
        %v1236 = vadd.f32 %v1215, %v1226
        %v1237 = vadd.f32 %v1216, %v1226
        %v1238 = vadd.f32 %v1217, %v1226
        %v1239 = vadd.f32 %v1218, %v1226
        %v1240 = vadd.f32 %v1219, %v1226
        %v1241 = vadd.f32 %v1220, %v1226
        %v1242 = vadd.f32 %v1221, %v1226
        %v1243 = vadd.f32 %v1222, %v1226
        %v1244 = vpack.c.bf16 %v1229, %v1228
        %v1245 = vpack.c.bf16 %v1231, %v1230
        %v1246 = vpack.c.bf16 %v1233, %v1232
        %v1247 = vpack.c.bf16 %v1235, %v1234
        %v1248 = vpack.c.bf16 %v1237, %v1236
        %v1249 = vpack.c.bf16 %v1239, %v1238
        %v1250 = vpack.c.bf16 %v1241, %v1240
        %v1251 = vpack.c.bf16 %v1243, %v1242
        %v1252 = vld [vmem:[#allocation14] sm:$0xff]
        %v1253 = vld [vmem:[#allocation14 + $0x8] sm:$0xf]
        %v1254 = vld [vmem:[#allocation14 + $0xc] sm:$0xff]
        %v1255 = vld [vmem:[#allocation14 + $0x14] sm:$0xf]
        %v1256 = vld [vmem:[#allocation14 + $0x18] sm:$0xff]
        %v1257 = vld [vmem:[#allocation14 + $0x20] sm:$0xf]
        %v1258 = vld [vmem:[#allocation14 + $0x24] sm:$0xff]
        %v1259 = vld [vmem:[#allocation14 + $0x2c] sm:$0xf]
        %v1260 = vld [vmem:[#allocation14 + $0x30] sm:$0xff]
        %v1261 = vld [vmem:[#allocation14 + $0x38] sm:$0xf]
        %v1262 = vld [vmem:[#allocation14 + $0x3c] sm:$0xff]
        %v1263 = vld [vmem:[#allocation14 + $0x44] sm:$0xf]
        %v1264 = vld [vmem:[#allocation14 + $0x48] sm:$0xff]
        %v1265 = vld [vmem:[#allocation14 + $0x50] sm:$0xf]
        %v1266 = vld [vmem:[#allocation14 + $0x54] sm:$0xff]
        %v1267 = vld [vmem:[#allocation14 + $0x5c] sm:$0xf]
        %v1268 = vld [vmem:[#allocation14 + $0x60] sm:$0xff]
        %v1269 = vld [vmem:[#allocation14 + $0x68] sm:$0xf]
        %v1270 = vld [vmem:[#allocation14 + $0x6c] sm:$0xff]
        %v1271 = vld [vmem:[#allocation14 + $0x74] sm:$0xf]
        %v1272 = vld [vmem:[#allocation14 + $0x78] sm:$0xff]
        %v1273 = vld [vmem:[#allocation14 + $0x80] sm:$0xf]
        %v1274 = vld [vmem:[#allocation14 + $0x84] sm:$0xff]
        %v1275 = vld [vmem:[#allocation14 + $0x8c] sm:$0xf]
        %v1276 = vld [vmem:[#allocation14 + $0x90] sm:$0xff]
        %v1277 = vld [vmem:[#allocation14 + $0x98] sm:$0xf]
        %v1278 = vld [vmem:[#allocation14 + $0x9c] sm:$0xff]
        %v1279 = vld [vmem:[#allocation14 + $0xa4] sm:$0xf]
        %v1280 = vld [vmem:[#allocation14 + $0xa8] sm:$0xff]
        %v1281 = vld [vmem:[#allocation14 + $0xb0] sm:$0xf]
        %v1282 = vld [vmem:[#allocation14 + $0xb4] sm:$0xff]
        %v1283 = vld [vmem:[#allocation14 + $0xbc] sm:$0xf]
        %v1316 = vunpack.c.l.b16 %v1252
        %v1317 = vunpack.c.h.b16 %v1252
        %v1318 = vunpack.c.l.b16 %v1253
        %v1319 = vunpack.c.l.b16 %v1254
        %v1320 = vunpack.c.h.b16 %v1254
        %v1321 = vunpack.c.l.b16 %v1255
        %v1322 = vunpack.c.l.b16 %v1256
        %v1323 = vunpack.c.h.b16 %v1256
        %v1324 = vunpack.c.l.b16 %v1257
        %v1325 = vunpack.c.l.b16 %v1258
        %v1326 = vunpack.c.h.b16 %v1258
        %v1327 = vunpack.c.l.b16 %v1259
        %v1328 = vunpack.c.l.b16 %v1260
        %v1329 = vunpack.c.h.b16 %v1260
        %v1330 = vunpack.c.l.b16 %v1261
        %v1331 = vunpack.c.l.b16 %v1262
        %v1332 = vunpack.c.h.b16 %v1262
        %v1333 = vunpack.c.l.b16 %v1263
        %v1334 = vunpack.c.l.b16 %v1264
        %v1335 = vunpack.c.h.b16 %v1264
        %v1336 = vunpack.c.l.b16 %v1265
        %v1337 = vunpack.c.l.b16 %v1266
        %v1338 = vunpack.c.h.b16 %v1266
        %v1339 = vunpack.c.l.b16 %v1267
        %v1340 = vunpack.c.l.b16 %v1268
        %v1341 = vunpack.c.h.b16 %v1268
        %v1342 = vunpack.c.l.b16 %v1269
        %v1343 = vunpack.c.l.b16 %v1270
        %v1344 = vunpack.c.h.b16 %v1270
        %v1345 = vunpack.c.l.b16 %v1271
        %v1346 = vunpack.c.l.b16 %v1272
        %v1347 = vunpack.c.h.b16 %v1272
        %v1348 = vunpack.c.l.b16 %v1273
        %v1349 = vunpack.c.l.b16 %v1274
        %v1350 = vunpack.c.h.b16 %v1274
        %v1351 = vunpack.c.l.b16 %v1275
        %v1352 = vunpack.c.l.b16 %v1276
        %v1353 = vunpack.c.h.b16 %v1276
        %v1354 = vunpack.c.l.b16 %v1277
        %v1355 = vunpack.c.l.b16 %v1278
        %v1356 = vunpack.c.h.b16 %v1278
        %v1357 = vunpack.c.l.b16 %v1279
        %v1358 = vunpack.c.l.b16 %v1280
        %v1359 = vunpack.c.h.b16 %v1280
        %v1360 = vunpack.c.l.b16 %v1281
        %v1361 = vunpack.c.l.b16 %v1282
        %v1362 = vunpack.c.h.b16 %v1282
        %v1363 = vunpack.c.l.b16 %v1283
        %v1364 = vpack.c.b16 %v1319, %v1316
        %v1365 = vpack.c.b16 %v1320, %v1317
        %v1366 = vpack.c.b16 %v1321, %v1318
        %v1367 = vpack.c.b16 %v1325, %v1322
        %v1368 = vpack.c.b16 %v1326, %v1323
        %v1369 = vpack.c.b16 %v1327, %v1324
        %v1370 = vpack.c.b16 %v1331, %v1328
        %v1371 = vpack.c.b16 %v1332, %v1329
        %v1372 = vpack.c.b16 %v1333, %v1330
        %v1373 = vpack.c.b16 %v1337, %v1334
        %v1374 = vpack.c.b16 %v1338, %v1335
        %v1375 = vpack.c.b16 %v1339, %v1336
        %v1376 = vpack.c.b16 %v1343, %v1340
        %v1377 = vpack.c.b16 %v1344, %v1341
        %v1378 = vpack.c.b16 %v1345, %v1342
        %v1379 = vpack.c.b16 %v1349, %v1346
        %v1380 = vpack.c.b16 %v1350, %v1347
        %v1381 = vpack.c.b16 %v1351, %v1348
        %v1382 = vpack.c.b16 %v1355, %v1352
        %v1383 = vpack.c.b16 %v1356, %v1353
        %v1384 = vpack.c.b16 %v1357, %v1354
        %v1385 = vpack.c.b16 %v1361, %v1358
        %v1386 = vpack.c.b16 %v1362, %v1359
        %v1387 = vpack.c.b16 %v1363, %v1360
        %1412 = vmatprep.subr.bf16.mxu0 %v1365
        %1413 = vmatpush1.bf16.msra.mxu0 %v1364
        %1414 = vmatprep.subr.bf16.mxu0 %v1368
        %1415 = vmatpush1.bf16.msra.mxu0 %v1367
        %1416 = vmatprep.subr.bf16.mxu0 %v1371
        %1417 = vmatpush1.bf16.msra.mxu0 %v1370
        %1418 = vmatprep.subr.bf16.mxu0 %v1374
        %1419 = vmatpush1.bf16.msra.mxu0 %v1373
        %1420 = vmatprep.subr.bf16.mxu0 %v1377
        %1421 = vmatpush1.bf16.msra.mxu0 %v1376
        %1422 = vmatprep.subr.bf16.mxu0 %v1380
        %1423 = vmatpush1.bf16.msra.mxu0 %v1379
        %1424 = vmatprep.subr.bf16.mxu0 %v1383
        %1425 = vmatpush1.bf16.msra.mxu0 %v1382
        %1426 = vmatprep.subr.bf16.mxu0 %v1386
        %1427 = vmatpush1.bf16.msra.mxu0 %v1385
        %1428 = vmatprep.subr.bf16.mxu0 0
        %1429 = vmatpush1.bf16.msra.mxu0 0
        %1430 = vmatprep.subr.bf16.mxu0 0
        %1431 = vmatpush1.bf16.msra.mxu0 0
        %1432 = vmatprep.subr.bf16.mxu0 0
        %1433 = vmatpush1.bf16.msra.mxu0 0
        %1434 = vmatprep.subr.bf16.mxu0 0
        %1435 = vmatpush1.bf16.msra.mxu0 0
        %1436 = vmatprep.subr.bf16.mxu0 0
        %1437 = vmatpush1.bf16.msra.mxu0 0
        %1438 = vmatprep.subr.bf16.mxu0 0
        %1439 = vmatpush1.bf16.msra.mxu0 0
        %1440 = vmatprep.subr.bf16.mxu0 0
        %1441 = vmatpush1.bf16.msra.mxu0 0
        %1442 = vmatprep.subr.bf16.mxu0 0
        %1443 = vmatpush1.bf16.msra.mxu0 0
        %1444 = vmatprep.mubr.bf16.mxu0 0
        %1445 = vmatmul.mubr.bf16.gmra.mrb[0].mxu0 %v1244
        %v1446 = vpop.f32.mrb[0].mxu0
        %v1447 = vadd.f32 0.0, %v1446
        %v1448 = vpop.f32.mrb[0].mxu0
        %v1449 = vadd.f32 0.0, %v1448
        %v1450 = vpop.f32.mrb[0].mxu0
        %v1451 = vadd.f32 0.0, %v1450
        %v1452 = vpop.f32.mrb[0].mxu0
        %v1453 = vadd.f32 0.0, %v1452
        %1454 = vmatprep.mubr.bf16.mxu0 0
        %1455 = vmatmul.mubr.bf16.gmra.mrb[0].mxu0 %v1245
        %v1456 = vpop.f32.mrb[0].mxu0
        %v1457 = vadd.f32 0.0, %v1456
        %v1458 = vpop.f32.mrb[0].mxu0
        %v1459 = vadd.f32 0.0, %v1458
        %v1460 = vpop.f32.mrb[0].mxu0
        %v1461 = vadd.f32 0.0, %v1460
        %v1462 = vpop.f32.mrb[0].mxu0
        %v1463 = vadd.f32 0.0, %v1462
        %1464 = vmatprep.mubr.bf16.mxu0 0
        %1465 = vmatmul.mubr.bf16.gmra.mrb[0].mxu0 %v1246
        %v1466 = vpop.f32.mrb[0].mxu0
        %v1467 = vadd.f32 0.0, %v1466
        %v1468 = vpop.f32.mrb[0].mxu0
        %v1469 = vadd.f32 0.0, %v1468
        %v1470 = vpop.f32.mrb[0].mxu0
        %v1471 = vadd.f32 0.0, %v1470
        %v1472 = vpop.f32.mrb[0].mxu0
        %v1473 = vadd.f32 0.0, %v1472
        %1474 = vmatprep.mubr.bf16.mxu0 0
        %1475 = vmatmul.mubr.bf16.gmra.mrb[0].mxu0 %v1247
        %v1476 = vpop.f32.mrb[0].mxu0
        %v1477 = vadd.f32 0.0, %v1476
        %v1478 = vpop.f32.mrb[0].mxu0
        %v1479 = vadd.f32 0.0, %v1478
        %v1480 = vpop.f32.mrb[0].mxu0
        %v1481 = vadd.f32 0.0, %v1480
        %v1482 = vpop.f32.mrb[0].mxu0
        %v1483 = vadd.f32 0.0, %v1482
        %1484 = vmatprep.mubr.bf16.mxu0 0
        %1485 = vmatmul.mubr.bf16.gmra.mrb[0].mxu0 %v1248
        %v1486 = vpop.f32.mrb[0].mxu0
        %v1487 = vadd.f32 0.0, %v1486
        %v1488 = vpop.f32.mrb[0].mxu0
        %v1489 = vadd.f32 0.0, %v1488
        %v1490 = vpop.f32.mrb[0].mxu0
        %v1491 = vadd.f32 0.0, %v1490
        %v1492 = vpop.f32.mrb[0].mxu0
        %v1493 = vadd.f32 0.0, %v1492
        %1494 = vmatprep.mubr.bf16.mxu0 0
        %1495 = vmatmul.mubr.bf16.gmra.mrb[0].mxu0 %v1249
        %v1496 = vpop.f32.mrb[0].mxu0
        %v1497 = vadd.f32 0.0, %v1496
        %v1498 = vpop.f32.mrb[0].mxu0
        %v1499 = vadd.f32 0.0, %v1498
        %v1500 = vpop.f32.mrb[0].mxu0
        %v1501 = vadd.f32 0.0, %v1500
        %v1502 = vpop.f32.mrb[0].mxu0
        %v1503 = vadd.f32 0.0, %v1502
        %1504 = vmatprep.mubr.bf16.mxu0 0
        %1505 = vmatmul.mubr.bf16.gmra.mrb[0].mxu0 %v1250
        %v1506 = vpop.f32.mrb[0].mxu0
        %v1507 = vadd.f32 0.0, %v1506
        %v1508 = vpop.f32.mrb[0].mxu0
        %v1509 = vadd.f32 0.0, %v1508
        %v1510 = vpop.f32.mrb[0].mxu0
        %v1511 = vadd.f32 0.0, %v1510
        %v1512 = vpop.f32.mrb[0].mxu0
        %v1513 = vadd.f32 0.0, %v1512
        %1514 = vmatprep.mubr.bf16.mxu0 0
        %1515 = vmatmul.mubr.bf16.gmra.mrb[0].mxu0 %v1251
        %v1516 = vpop.f32.mrb[0].mxu0
        %v1517 = vadd.f32 0.0, %v1516
        %v1518 = vpop.f32.mrb[0].mxu0
        %v1519 = vadd.f32 0.0, %v1518
        %v1520 = vpop.f32.mrb[0].mxu0
        %v1521 = vadd.f32 0.0, %v1520
        %v1522 = vpop.f32.mrb[0].mxu0
        %v1523 = vadd.f32 0.0, %v1522
        %1524 = vdwg.mxu0
        %1525 = vmatprep.subr.bf16.mxu0 0
        %1526 = vmatpush1.bf16.msra.mxu0 %v1366
        %1527 = vmatprep.subr.bf16.mxu0 0
        %1528 = vmatpush1.bf16.msra.mxu0 %v1369
        %1529 = vmatprep.subr.bf16.mxu0 0
        %1530 = vmatpush1.bf16.msra.mxu0 %v1372
        %1531 = vmatprep.subr.bf16.mxu0 0
        %1532 = vmatpush1.bf16.msra.mxu0 %v1375
        %1533 = vmatprep.subr.bf16.mxu0 0
        %1534 = vmatpush1.bf16.msra.mxu0 %v1378
        %1535 = vmatprep.subr.bf16.mxu0 0
        %1536 = vmatpush1.bf16.msra.mxu0 %v1381
        %1537 = vmatprep.subr.bf16.mxu0 0
        %1538 = vmatpush1.bf16.msra.mxu0 %v1384
        %1539 = vmatprep.subr.bf16.mxu0 0
        %1540 = vmatpush1.bf16.msra.mxu0 %v1387
        %1541 = vmatprep.subr.bf16.mxu0 0
        %1542 = vmatpush1.bf16.msra.mxu0 0
        %1543 = vmatprep.subr.bf16.mxu0 0
        %1544 = vmatpush1.bf16.msra.mxu0 0
        %1545 = vmatprep.subr.bf16.mxu0 0
        %1546 = vmatpush1.bf16.msra.mxu0 0
        %1547 = vmatprep.subr.bf16.mxu0 0
        %1548 = vmatpush1.bf16.msra.mxu0 0
        %1549 = vmatprep.subr.bf16.mxu0 0
        %1550 = vmatpush1.bf16.msra.mxu0 0
        %1551 = vmatprep.subr.bf16.mxu0 0
        %1552 = vmatpush1.bf16.msra.mxu0 0
        %1553 = vmatprep.subr.bf16.mxu0 0
        %1554 = vmatpush1.bf16.msra.mxu0 0
        %1555 = vmatprep.subr.bf16.mxu0 0
        %1556 = vmatpush1.bf16.msra.mxu0 0
        %1557 = vmatprep.mubr.bf16.mxu0 0
        %1558 = vmatmul.mubr.bf16.gmra.mrb[0].mxu0 %v1244
        %v1559 = vpop.f32.mrb[0].mxu0
        %v1560 = vadd.f32 0.0, %v1559
        %v1561 = vpop.f32.mrb[0].mxu0
        %v1562 = vpop.f32.mrb[0].mxu0
        %v1563 = vadd.f32 0.0, %v1562
        %v1564 = vpop.f32.mrb[0].mxu0
        %1565 = vmatprep.mubr.bf16.mxu0 0
        %1566 = vmatmul.mubr.bf16.gmra.mrb[0].mxu0 %v1245
        %v1567 = vpop.f32.mrb[0].mxu0
        %v1568 = vadd.f32 0.0, %v1567
        %v1569 = vpop.f32.mrb[0].mxu0
        %v1570 = vpop.f32.mrb[0].mxu0
        %v1571 = vadd.f32 0.0, %v1570
        %v1572 = vpop.f32.mrb[0].mxu0
        %1573 = vmatprep.mubr.bf16.mxu0 0
        %1574 = vmatmul.mubr.bf16.gmra.mrb[0].mxu0 %v1246
        %v1575 = vpop.f32.mrb[0].mxu0
        %v1576 = vadd.f32 0.0, %v1575
        %v1577 = vpop.f32.mrb[0].mxu0
        %v1578 = vpop.f32.mrb[0].mxu0
        %v1579 = vadd.f32 0.0, %v1578
        %v1580 = vpop.f32.mrb[0].mxu0
        %1581 = vmatprep.mubr.bf16.mxu0 0
        %1582 = vmatmul.mubr.bf16.gmra.mrb[0].mxu0 %v1247
        %v1583 = vpop.f32.mrb[0].mxu0
        %v1584 = vadd.f32 0.0, %v1583
        %v1585 = vpop.f32.mrb[0].mxu0
        %v1586 = vpop.f32.mrb[0].mxu0
        %v1587 = vadd.f32 0.0, %v1586
        %v1588 = vpop.f32.mrb[0].mxu0
        %1589 = vmatprep.mubr.bf16.mxu0 0
        %1590 = vmatmul.mubr.bf16.gmra.mrb[0].mxu0 %v1248
        %v1591 = vpop.f32.mrb[0].mxu0
        %v1592 = vadd.f32 0.0, %v1591
        %v1593 = vpop.f32.mrb[0].mxu0
        %v1594 = vpop.f32.mrb[0].mxu0
        %v1595 = vadd.f32 0.0, %v1594
        %v1596 = vpop.f32.mrb[0].mxu0
        %1597 = vmatprep.mubr.bf16.mxu0 0
        %1598 = vmatmul.mubr.bf16.gmra.mrb[0].mxu0 %v1249
        %v1599 = vpop.f32.mrb[0].mxu0
        %v1600 = vadd.f32 0.0, %v1599
        %v1601 = vpop.f32.mrb[0].mxu0
        %v1602 = vpop.f32.mrb[0].mxu0
        %v1603 = vadd.f32 0.0, %v1602
        %v1604 = vpop.f32.mrb[0].mxu0
        %1605 = vmatprep.mubr.bf16.mxu0 0
        %1606 = vmatmul.mubr.bf16.gmra.mrb[0].mxu0 %v1250
        %v1607 = vpop.f32.mrb[0].mxu0
        %v1608 = vadd.f32 0.0, %v1607
        %v1609 = vpop.f32.mrb[0].mxu0
        %v1610 = vpop.f32.mrb[0].mxu0
        %v1611 = vadd.f32 0.0, %v1610
        %v1612 = vpop.f32.mrb[0].mxu0
        %1613 = vmatprep.mubr.bf16.mxu0 0
        %1614 = vmatmul.mubr.bf16.gmra.mrb[0].mxu0 %v1251
        %v1615 = vpop.f32.mrb[0].mxu0
        %v1616 = vadd.f32 0.0, %v1615
        %v1617 = vpop.f32.mrb[0].mxu0
        %v1618 = vpop.f32.mrb[0].mxu0
        %v1619 = vadd.f32 0.0, %v1618
        %v1620 = vpop.f32.mrb[0].mxu0
        %1621 = vdwg.mxu0
        %v1622 = vld [vmem:[%s527] sm:$0xf]
        %v1623 = vld [vmem:[%s527 + $0x4] sm:$0xf]
        %v1624 = vld [vmem:[%s527 + $0x8] sm:$0xf]
        %v1625 = vld [vmem:[%s527 + $0xc] sm:$0xf]
        %v1626 = vld [vmem:[%s527 + $0x10] sm:$0xf]
        %v1627 = vld [vmem:[%s527 + $0x14] sm:$0xf]
        %v1628 = vld [vmem:[%s527 + $0x18] sm:$0xf]
        %v1629 = vld [vmem:[%s527 + $0x1c] sm:$0xf]
        %v1630 = vld [vmem:[%s527 + $0x20] sm:$0xf]
        %v1631 = vld [vmem:[%s527 + $0x24] sm:$0xf]
        %v1632 = vld [vmem:[%s527 + $0x28] sm:$0xf]
        %v1633 = vld [vmem:[%s527 + $0x2c] sm:$0xf]
        %v1634 = vld [vmem:[%s527 + $0x30] sm:$0xf]
        %v1635 = vld [vmem:[%s527 + $0x34] sm:$0xf]
        %v1636 = vld [vmem:[%s527 + $0x38] sm:$0xf]
        %v1637 = vld [vmem:[%s527 + $0x3c] sm:$0xf]
        %v1638 = vld [vmem:[%s536] sm:$0xf]
        %v1639 = vld [vmem:[%s536 + $0x4] sm:$0xf]
        %v1640 = vld [vmem:[%s536 + $0x8] sm:$0xf]
        %v1641 = vld [vmem:[%s536 + $0xc] sm:$0xf]
        %v1642 = vld [vmem:[%s536 + $0x10] sm:$0xf]
        %v1643 = vld [vmem:[%s536 + $0x14] sm:$0xf]
        %v1644 = vld [vmem:[%s536 + $0x18] sm:$0xf]
        %v1645 = vld [vmem:[%s536 + $0x1c] sm:$0xf]
        %v1646 = vld [vmem:[%s536 + $0x20] sm:$0xf]
        %v1647 = vld [vmem:[%s536 + $0x24] sm:$0xf]
        %v1648 = vld [vmem:[%s536 + $0x28] sm:$0xf]
        %v1649 = vld [vmem:[%s536 + $0x2c] sm:$0xf]
        %v1650 = vld [vmem:[%s536 + $0x30] sm:$0xf]
        %v1651 = vld [vmem:[%s536 + $0x34] sm:$0xf]
        %v1652 = vld [vmem:[%s536 + $0x38] sm:$0xf]
        %v1653 = vld [vmem:[%s536 + $0x3c] sm:$0xf]
        %v1654 = vlaneseq
        %v1655 = vand.u32 %v1654, 127
        %vm1656 = vcmp.lt.s32.totalorder %v1655, 0
        %v1657 = vsub.s32 0, %v1655
        %v1658 = vsel %vm1656, %v1657, %v1655
        %v1659 = vshrl.u32 %v1658, 6
        %v1660 = vand.u32 %v1658, 63
        %v1661 = vsub.s32 0, %v1660
        %v1662 = vsel %vm1656, %v1661, %v1660
        %vm1663 = vcmp.ne.s32.totalorder %v1662, 0
        %vm1664 = vcmp.lt.s32.totalorder %v1662, 0
        %vm1665 = vmand %vm1664, %vm1663
        %v1666 = vadd.s32 %v1662, 64
        %v1667 = vsel %vm1665, %v1666, %v1662
        %vm1668 = vcmp.lt.s32.totalorder %v1667, 32
        %1669 = vrot.lane.b32.xlu0 %v1447, 32
        %v1670 = vpop.permute.xlu0 %1669
        %1671 = vrot.lane.b32.xlu0 %v1451, 32
        %v1672 = vpop.permute.xlu0 %1671
        %1673 = vrot.lane.b32.xlu0 %v1457, 32
        %v1674 = vpop.permute.xlu0 %1673
        %1675 = vrot.lane.b32.xlu0 %v1461, 32
        %v1676 = vpop.permute.xlu0 %1675
        %1677 = vrot.lane.b32.xlu0 %v1467, 32
        %v1678 = vpop.permute.xlu0 %1677
        %1679 = vrot.lane.b32.xlu0 %v1471, 32
        %v1680 = vpop.permute.xlu0 %1679
        %1681 = vrot.lane.b32.xlu0 %v1477, 32
        %v1682 = vpop.permute.xlu0 %1681
        %1683 = vrot.lane.b32.xlu0 %v1481, 32
        %v1684 = vpop.permute.xlu0 %1683
        %1685 = vrot.lane.b32.xlu0 %v1487, 32
        %v1686 = vpop.permute.xlu0 %1685
        %1687 = vrot.lane.b32.xlu0 %v1491, 32
        %v1688 = vpop.permute.xlu0 %1687
        %1689 = vrot.lane.b32.xlu0 %v1497, 32
        %v1690 = vpop.permute.xlu0 %1689
        %1691 = vrot.lane.b32.xlu0 %v1501, 32
        %v1692 = vpop.permute.xlu0 %1691
        %1693 = vrot.lane.b32.xlu0 %v1507, 32
        %v1694 = vpop.permute.xlu0 %1693
        %1695 = vrot.lane.b32.xlu0 %v1511, 32
        %v1696 = vpop.permute.xlu0 %1695
        %1697 = vrot.lane.b32.xlu0 %v1517, 32
        %v1698 = vpop.permute.xlu0 %1697
        %1699 = vrot.lane.b32.xlu0 %v1521, 32
        %v1700 = vpop.permute.xlu0 %1699
        %1701 = vrot.lane.b32.xlu0 %v1447, 96
        %v1702 = vpop.permute.xlu0 %1701
        %1703 = vrot.lane.b32.xlu0 %v1451, 96
        %v1704 = vpop.permute.xlu0 %1703
        %1705 = vrot.lane.b32.xlu0 %v1457, 96
        %v1706 = vpop.permute.xlu0 %1705
        %1707 = vrot.lane.b32.xlu0 %v1461, 96
        %v1708 = vpop.permute.xlu0 %1707
        %1709 = vrot.lane.b32.xlu0 %v1467, 96
        %v1710 = vpop.permute.xlu0 %1709
        %1711 = vrot.lane.b32.xlu0 %v1471, 96
        %v1712 = vpop.permute.xlu0 %1711
        %1713 = vrot.lane.b32.xlu0 %v1477, 96
        %v1714 = vpop.permute.xlu0 %1713
        %1715 = vrot.lane.b32.xlu0 %v1481, 96
        %v1716 = vpop.permute.xlu0 %1715
        %1717 = vrot.lane.b32.xlu0 %v1487, 96
        %v1718 = vpop.permute.xlu0 %1717
        %1719 = vrot.lane.b32.xlu0 %v1491, 96
        %v1720 = vpop.permute.xlu0 %1719
        %1721 = vrot.lane.b32.xlu0 %v1497, 96
        %v1722 = vpop.permute.xlu0 %1721
        %1723 = vrot.lane.b32.xlu0 %v1501, 96
        %v1724 = vpop.permute.xlu0 %1723
        %1725 = vrot.lane.b32.xlu0 %v1507, 96
        %v1726 = vpop.permute.xlu0 %1725
        %1727 = vrot.lane.b32.xlu0 %v1511, 96
        %v1728 = vpop.permute.xlu0 %1727
        %1729 = vrot.lane.b32.xlu0 %v1517, 96
        %v1730 = vpop.permute.xlu0 %1729
        %1731 = vrot.lane.b32.xlu0 %v1521, 96
        %v1732 = vpop.permute.xlu0 %1731
        %v1733 = vsub.f32 0.0, %v1702
        %v1734 = vsub.f32 0.0, %v1704
        %v1735 = vsub.f32 0.0, %v1706
        %v1736 = vsub.f32 0.0, %v1708
        %v1737 = vsub.f32 0.0, %v1710
        %v1738 = vsub.f32 0.0, %v1712
        %v1739 = vsub.f32 0.0, %v1714
        %v1740 = vsub.f32 0.0, %v1716
        %v1741 = vsub.f32 0.0, %v1718
        %v1742 = vsub.f32 0.0, %v1720
        %v1743 = vsub.f32 0.0, %v1722
        %v1744 = vsub.f32 0.0, %v1724
        %v1745 = vsub.f32 0.0, %v1726
        %v1746 = vsub.f32 0.0, %v1728
        %v1747 = vsub.f32 0.0, %v1730
        %v1748 = vsub.f32 0.0, %v1732
        %v1749 = vsel %vm1668, %v1733, %v1670
        %v1750 = vsel %vm1668, %v1734, %v1672
        %v1751 = vsel %vm1668, %v1735, %v1674
        %v1752 = vsel %vm1668, %v1736, %v1676
        %v1753 = vsel %vm1668, %v1737, %v1678
        %v1754 = vsel %vm1668, %v1738, %v1680
        %v1755 = vsel %vm1668, %v1739, %v1682
        %v1756 = vsel %vm1668, %v1740, %v1684
        %v1757 = vsel %vm1668, %v1741, %v1686
        %v1758 = vsel %vm1668, %v1742, %v1688
        %v1759 = vsel %vm1668, %v1743, %v1690
        %v1760 = vsel %vm1668, %v1744, %v1692
        %v1761 = vsel %vm1668, %v1745, %v1694
        %v1762 = vsel %vm1668, %v1746, %v1696
        %v1763 = vsel %vm1668, %v1747, %v1698
        %v1764 = vsel %vm1668, %v1748, %v1700
        %v1765 = vunpack.c.l.bf16 %v1622
        %v1766 = vunpack.c.l.bf16 %v1623
        %v1767 = vunpack.c.l.bf16 %v1624
        %v1768 = vunpack.c.l.bf16 %v1625
        %v1769 = vunpack.c.l.bf16 %v1626
        %v1770 = vunpack.c.l.bf16 %v1627
        %v1771 = vunpack.c.l.bf16 %v1628
        %v1772 = vunpack.c.l.bf16 %v1629
        %v1773 = vunpack.c.l.bf16 %v1630
        %v1774 = vunpack.c.l.bf16 %v1631
        %v1775 = vunpack.c.l.bf16 %v1632
        %v1776 = vunpack.c.l.bf16 %v1633
        %v1777 = vunpack.c.l.bf16 %v1634
        %v1778 = vunpack.c.l.bf16 %v1635
        %v1779 = vunpack.c.l.bf16 %v1636
        %v1780 = vunpack.c.l.bf16 %v1637
        %v1781 = vmul.f32 %v1447, %v1765
        %v1782 = vmul.f32 %v1451, %v1766
        %v1783 = vmul.f32 %v1457, %v1767
        %v1784 = vmul.f32 %v1461, %v1768
        %v1785 = vmul.f32 %v1467, %v1769
        %v1786 = vmul.f32 %v1471, %v1770
        %v1787 = vmul.f32 %v1477, %v1771
        %v1788 = vmul.f32 %v1481, %v1772
        %v1789 = vmul.f32 %v1487, %v1773
        %v1790 = vmul.f32 %v1491, %v1774
        %v1791 = vmul.f32 %v1497, %v1775
        %v1792 = vmul.f32 %v1501, %v1776
        %v1793 = vmul.f32 %v1507, %v1777
        %v1794 = vmul.f32 %v1511, %v1778
        %v1795 = vmul.f32 %v1517, %v1779
        %v1796 = vmul.f32 %v1521, %v1780
        %v1797 = vunpack.c.l.bf16 %v1638
        %v1798 = vunpack.c.l.bf16 %v1639
        %v1799 = vunpack.c.l.bf16 %v1640
        %v1800 = vunpack.c.l.bf16 %v1641
        %v1801 = vunpack.c.l.bf16 %v1642
        %v1802 = vunpack.c.l.bf16 %v1643
        %v1803 = vunpack.c.l.bf16 %v1644
        %v1804 = vunpack.c.l.bf16 %v1645
        %v1805 = vunpack.c.l.bf16 %v1646
        %v1806 = vunpack.c.l.bf16 %v1647
        %v1807 = vunpack.c.l.bf16 %v1648
        %v1808 = vunpack.c.l.bf16 %v1649
        %v1809 = vunpack.c.l.bf16 %v1650
        %v1810 = vunpack.c.l.bf16 %v1651
        %v1811 = vunpack.c.l.bf16 %v1652
        %v1812 = vunpack.c.l.bf16 %v1653
        %v1813 = vmul.f32 %v1749, %v1797
        %v1814 = vmul.f32 %v1750, %v1798
        %v1815 = vmul.f32 %v1751, %v1799
        %v1816 = vmul.f32 %v1752, %v1800
        %v1817 = vmul.f32 %v1753, %v1801
        %v1818 = vmul.f32 %v1754, %v1802
        %v1819 = vmul.f32 %v1755, %v1803
        %v1820 = vmul.f32 %v1756, %v1804
        %v1821 = vmul.f32 %v1757, %v1805
        %v1822 = vmul.f32 %v1758, %v1806
        %v1823 = vmul.f32 %v1759, %v1807
        %v1824 = vmul.f32 %v1760, %v1808
        %v1825 = vmul.f32 %v1761, %v1809
        %v1826 = vmul.f32 %v1762, %v1810
        %v1827 = vmul.f32 %v1763, %v1811
        %v1828 = vmul.f32 %v1764, %v1812
        %v1829 = vadd.f32 %v1781, %v1813
        %v1830 = vadd.f32 %v1782, %v1814
        %v1831 = vadd.f32 %v1783, %v1815
        %v1832 = vadd.f32 %v1784, %v1816
        %v1833 = vadd.f32 %v1785, %v1817
        %v1834 = vadd.f32 %v1786, %v1818
        %v1835 = vadd.f32 %v1787, %v1819
        %v1836 = vadd.f32 %v1788, %v1820
        %v1837 = vadd.f32 %v1789, %v1821
        %v1838 = vadd.f32 %v1790, %v1822
        %v1839 = vadd.f32 %v1791, %v1823
        %v1840 = vadd.f32 %v1792, %v1824
        %v1841 = vadd.f32 %v1793, %v1825
        %v1842 = vadd.f32 %v1794, %v1826
        %v1843 = vadd.f32 %v1795, %v1827
        %v1844 = vadd.f32 %v1796, %v1828
        %1845 = vrot.lane.b32.xlu0 %v1449, 32
        %v1846 = vpop.permute.xlu0 %1845
        %1847 = vrot.lane.b32.xlu0 %v1453, 32
        %v1848 = vpop.permute.xlu0 %1847
        %1849 = vrot.lane.b32.xlu0 %v1459, 32
        %v1850 = vpop.permute.xlu0 %1849
        %1851 = vrot.lane.b32.xlu0 %v1463, 32
        %v1852 = vpop.permute.xlu0 %1851
        %1853 = vrot.lane.b32.xlu0 %v1469, 32
        %v1854 = vpop.permute.xlu0 %1853
        %1855 = vrot.lane.b32.xlu0 %v1473, 32
        %v1856 = vpop.permute.xlu0 %1855
        %1857 = vrot.lane.b32.xlu0 %v1479, 32
        %v1858 = vpop.permute.xlu0 %1857
        %1859 = vrot.lane.b32.xlu0 %v1483, 32
        %v1860 = vpop.permute.xlu0 %1859
        %1861 = vrot.lane.b32.xlu0 %v1489, 32
        %v1862 = vpop.permute.xlu0 %1861
        %1863 = vrot.lane.b32.xlu0 %v1493, 32
        %v1864 = vpop.permute.xlu0 %1863
        %1865 = vrot.lane.b32.xlu0 %v1499, 32
        %v1866 = vpop.permute.xlu0 %1865
        %1867 = vrot.lane.b32.xlu0 %v1503, 32
        %v1868 = vpop.permute.xlu0 %1867
        %1869 = vrot.lane.b32.xlu0 %v1509, 32
        %v1870 = vpop.permute.xlu0 %1869
        %1871 = vrot.lane.b32.xlu0 %v1513, 32
        %v1872 = vpop.permute.xlu0 %1871
        %1873 = vrot.lane.b32.xlu0 %v1519, 32
        %v1874 = vpop.permute.xlu0 %1873
        %1875 = vrot.lane.b32.xlu0 %v1523, 32
        %v1876 = vpop.permute.xlu0 %1875
        %1877 = vrot.lane.b32.xlu0 %v1449, 96
        %v1878 = vpop.permute.xlu0 %1877
        %1879 = vrot.lane.b32.xlu0 %v1453, 96
        %v1880 = vpop.permute.xlu0 %1879
        %1881 = vrot.lane.b32.xlu0 %v1459, 96
        %v1882 = vpop.permute.xlu0 %1881
        %1883 = vrot.lane.b32.xlu0 %v1463, 96
        %v1884 = vpop.permute.xlu0 %1883
        %1885 = vrot.lane.b32.xlu0 %v1469, 96
        %v1886 = vpop.permute.xlu0 %1885
        %1887 = vrot.lane.b32.xlu0 %v1473, 96
        %v1888 = vpop.permute.xlu0 %1887
        %1889 = vrot.lane.b32.xlu0 %v1479, 96
        %v1890 = vpop.permute.xlu0 %1889
        %1891 = vrot.lane.b32.xlu0 %v1483, 96
        %v1892 = vpop.permute.xlu0 %1891
        %1893 = vrot.lane.b32.xlu0 %v1489, 96
        %v1894 = vpop.permute.xlu0 %1893
        %1895 = vrot.lane.b32.xlu0 %v1493, 96
        %v1896 = vpop.permute.xlu0 %1895
        %1897 = vrot.lane.b32.xlu0 %v1499, 96
        %v1898 = vpop.permute.xlu0 %1897
        %1899 = vrot.lane.b32.xlu0 %v1503, 96
        %v1900 = vpop.permute.xlu0 %1899
        %1901 = vrot.lane.b32.xlu0 %v1509, 96
        %v1902 = vpop.permute.xlu0 %1901
        %1903 = vrot.lane.b32.xlu0 %v1513, 96
        %v1904 = vpop.permute.xlu0 %1903
        %1905 = vrot.lane.b32.xlu0 %v1519, 96
        %v1906 = vpop.permute.xlu0 %1905
        %1907 = vrot.lane.b32.xlu0 %v1523, 96
        %v1908 = vpop.permute.xlu0 %1907
        %v1909 = vsub.f32 0.0, %v1878
        %v1910 = vsub.f32 0.0, %v1880
        %v1911 = vsub.f32 0.0, %v1882
        %v1912 = vsub.f32 0.0, %v1884
        %v1913 = vsub.f32 0.0, %v1886
        %v1914 = vsub.f32 0.0, %v1888
        %v1915 = vsub.f32 0.0, %v1890
        %v1916 = vsub.f32 0.0, %v1892
        %v1917 = vsub.f32 0.0, %v1894
        %v1918 = vsub.f32 0.0, %v1896
        %v1919 = vsub.f32 0.0, %v1898
        %v1920 = vsub.f32 0.0, %v1900
        %v1921 = vsub.f32 0.0, %v1902
        %v1922 = vsub.f32 0.0, %v1904
        %v1923 = vsub.f32 0.0, %v1906
        %v1924 = vsub.f32 0.0, %v1908
        %v1925 = vsel %vm1668, %v1909, %v1846
        %v1926 = vsel %vm1668, %v1910, %v1848
        %v1927 = vsel %vm1668, %v1911, %v1850
        %v1928 = vsel %vm1668, %v1912, %v1852
        %v1929 = vsel %vm1668, %v1913, %v1854
        %v1930 = vsel %vm1668, %v1914, %v1856
        %v1931 = vsel %vm1668, %v1915, %v1858
        %v1932 = vsel %vm1668, %v1916, %v1860
        %v1933 = vsel %vm1668, %v1917, %v1862
        %v1934 = vsel %vm1668, %v1918, %v1864
        %v1935 = vsel %vm1668, %v1919, %v1866
        %v1936 = vsel %vm1668, %v1920, %v1868
        %v1937 = vsel %vm1668, %v1921, %v1870
        %v1938 = vsel %vm1668, %v1922, %v1872
        %v1939 = vsel %vm1668, %v1923, %v1874
        %v1940 = vsel %vm1668, %v1924, %v1876
        %v1941 = vmul.f32 %v1449, %v1765
        %v1942 = vmul.f32 %v1453, %v1766
        %v1943 = vmul.f32 %v1459, %v1767
        %v1944 = vmul.f32 %v1463, %v1768
        %v1945 = vmul.f32 %v1469, %v1769
        %v1946 = vmul.f32 %v1473, %v1770
        %v1947 = vmul.f32 %v1479, %v1771
        %v1948 = vmul.f32 %v1483, %v1772
        %v1949 = vmul.f32 %v1489, %v1773
        %v1950 = vmul.f32 %v1493, %v1774
        %v1951 = vmul.f32 %v1499, %v1775
        %v1952 = vmul.f32 %v1503, %v1776
        %v1953 = vmul.f32 %v1509, %v1777
        %v1954 = vmul.f32 %v1513, %v1778
        %v1955 = vmul.f32 %v1519, %v1779
        %v1956 = vmul.f32 %v1523, %v1780
        %v1957 = vmul.f32 %v1925, %v1797
        %v1958 = vmul.f32 %v1926, %v1798
        %v1959 = vmul.f32 %v1927, %v1799
        %v1960 = vmul.f32 %v1928, %v1800
        %v1961 = vmul.f32 %v1929, %v1801
        %v1962 = vmul.f32 %v1930, %v1802
        %v1963 = vmul.f32 %v1931, %v1803
        %v1964 = vmul.f32 %v1932, %v1804
        %v1965 = vmul.f32 %v1933, %v1805
        %v1966 = vmul.f32 %v1934, %v1806
        %v1967 = vmul.f32 %v1935, %v1807
        %v1968 = vmul.f32 %v1936, %v1808
        %v1969 = vmul.f32 %v1937, %v1809
        %v1970 = vmul.f32 %v1938, %v1810
        %v1971 = vmul.f32 %v1939, %v1811
        %v1972 = vmul.f32 %v1940, %v1812
        %v1973 = vadd.f32 %v1941, %v1957
        %v1974 = vadd.f32 %v1942, %v1958
        %v1975 = vadd.f32 %v1943, %v1959
        %v1976 = vadd.f32 %v1944, %v1960
        %v1977 = vadd.f32 %v1945, %v1961
        %v1978 = vadd.f32 %v1946, %v1962
        %v1979 = vadd.f32 %v1947, %v1963
        %v1980 = vadd.f32 %v1948, %v1964
        %v1981 = vadd.f32 %v1949, %v1965
        %v1982 = vadd.f32 %v1950, %v1966
        %v1983 = vadd.f32 %v1951, %v1967
        %v1984 = vadd.f32 %v1952, %v1968
        %v1985 = vadd.f32 %v1953, %v1969
        %v1986 = vadd.f32 %v1954, %v1970
        %v1987 = vadd.f32 %v1955, %v1971
        %v1988 = vadd.f32 %v1956, %v1972
        %1989 = vxpose.xlu0.b32.start [1/16] %v1973, 128
        %1990 = vxpose.xlu0.b32.cont [2/16] %v1974, 128
        %1991 = vxpose.xlu0.b32.cont [3/16] %v1975, 128
        %1992 = vxpose.xlu0.b32.cont [4/16] %v1976, 128
        %1993 = vxpose.xlu0.b32.cont [5/16] %v1977, 128
        %1994 = vxpose.xlu0.b32.cont [6/16] %v1978, 128
        %1995 = vxpose.xlu0.b32.cont [7/16] %v1979, 128
        %1996 = vxpose.xlu0.b32.cont [8/16] %v1980, 128
        %1997 = vxpose.xlu0.b32.cont [9/16] %v1981, 128
        %1998 = vxpose.xlu0.b32.cont [10/16] %v1982, 128
        %1999 = vxpose.xlu0.b32.cont [11/16] %v1983, 128
        %2000 = vxpose.xlu0.b32.cont [12/16] %v1984, 128
        %2001 = vxpose.xlu0.b32.cont [13/16] %v1985, 128
        %2002 = vxpose.xlu0.b32.cont [14/16] %v1986, 128
        %2003 = vxpose.xlu0.b32.cont [15/16] %v1987, 128
        %2004 = vxpose.xlu0.b32.end [16/16] %v1988, 128
        %v2005 = vpop.trf.xlu0
        %v2006 = vpop.trf.xlu0
        %v2007 = vpop.trf.xlu0
        %v2008 = vpop.trf.xlu0
        %v2009 = vpop.trf.xlu0
        %v2010 = vpop.trf.xlu0
        %v2011 = vpop.trf.xlu0
        %v2012 = vpop.trf.xlu0
        %v2013 = vpop.trf.xlu0
        %v2014 = vpop.trf.xlu0
        %v2015 = vpop.trf.xlu0
        %v2016 = vpop.trf.xlu0
        %v2017 = vpop.trf.xlu0
        %v2018 = vpop.trf.xlu0
        %v2019 = vpop.trf.xlu0
        %v2020 = vpop.trf.xlu0
        %v2021 = vpack.c.bf16 %v1830, %v1829
        %v2022 = vpack.c.bf16 %v1832, %v1831
        %v2023 = vpack.c.bf16 %v1834, %v1833
        %v2024 = vpack.c.bf16 %v1836, %v1835
        %v2025 = vpack.c.bf16 %v1838, %v1837
        %v2026 = vpack.c.bf16 %v1840, %v1839
        %v2027 = vpack.c.bf16 %v1842, %v1841
        %v2028 = vpack.c.bf16 %v1844, %v1843
        %v2037 = vunpack.c.l.b16 %v2021
        %v2038 = vunpack.c.h.b16 %v2021
        %v2039 = vunpack.c.l.b16 %v2022
        %v2040 = vunpack.c.h.b16 %v2022
        %v2041 = vunpack.c.l.b16 %v2023
        %v2042 = vunpack.c.h.b16 %v2023
        %v2043 = vunpack.c.l.b16 %v2024
        %v2044 = vunpack.c.h.b16 %v2024
        %v2045 = vunpack.c.l.b16 %v2025
        %v2046 = vunpack.c.h.b16 %v2025
        %v2047 = vunpack.c.l.b16 %v2026
        %v2048 = vunpack.c.h.b16 %v2026
        %v2049 = vunpack.c.l.b16 %v2027
        %v2050 = vunpack.c.h.b16 %v2027
        %v2051 = vunpack.c.l.b16 %v2028
        %v2052 = vunpack.c.h.b16 %v2028
        %v2053 = vpack.c.b16 %v2037, %v2037
        %v2054 = vpack.c.b16 %v2038, %v2038
        %v2055 = vpack.c.b16 %v2039, %v2039
        %v2056 = vpack.c.b16 %v2040, %v2040
        %v2057 = vpack.c.b16 %v2041, %v2041
        %v2058 = vpack.c.b16 %v2042, %v2042
        %v2059 = vpack.c.b16 %v2043, %v2043
        %v2060 = vpack.c.b16 %v2044, %v2044
        %v2061 = vpack.c.b16 %v2045, %v2045
        %v2062 = vpack.c.b16 %v2046, %v2046
        %v2063 = vpack.c.b16 %v2047, %v2047
        %v2064 = vpack.c.b16 %v2048, %v2048
        %v2065 = vpack.c.b16 %v2049, %v2049
        %v2066 = vpack.c.b16 %v2050, %v2050
        %v2067 = vpack.c.b16 %v2051, %v2051
        %v2068 = vpack.c.b16 %v2052, %v2052
        %vm2085 = vcmask 519168
        %2086 = vst.msk [vmem:[%s605] sm:$0xf] %vm2085, %v2053
        %2087 = vst.msk [vmem:[%s605 + $0x4] sm:$0xf] %vm2085, %v2054
        %2088 = vst.msk [vmem:[%s605 + $0x8] sm:$0xf] %vm2085, %v2055
        %2089 = vst.msk [vmem:[%s605 + $0xc] sm:$0xf] %vm2085, %v2056
        %2090 = vst.msk [vmem:[%s605 + $0x10] sm:$0xf] %vm2085, %v2057
        %2091 = vst.msk [vmem:[%s605 + $0x14] sm:$0xf] %vm2085, %v2058
        %2092 = vst.msk [vmem:[%s605 + $0x18] sm:$0xf] %vm2085, %v2059
        %2093 = vst.msk [vmem:[%s605 + $0x1c] sm:$0xf] %vm2085, %v2060
        %2094 = vst.msk [vmem:[%s605 + $0x20] sm:$0xf] %vm2085, %v2061
        %2095 = vst.msk [vmem:[%s605 + $0x24] sm:$0xf] %vm2085, %v2062
        %2096 = vst.msk [vmem:[%s605 + $0x28] sm:$0xf] %vm2085, %v2063
        %2097 = vst.msk [vmem:[%s605 + $0x2c] sm:$0xf] %vm2085, %v2064
        %2098 = vst.msk [vmem:[%s605 + $0x30] sm:$0xf] %vm2085, %v2065
        %2099 = vst.msk [vmem:[%s605 + $0x34] sm:$0xf] %vm2085, %v2066
        %2100 = vst.msk [vmem:[%s605 + $0x38] sm:$0xf] %vm2085, %v2067
        %2101 = vst.msk [vmem:[%s605 + $0x3c] sm:$0xf] %vm2085, %v2068
        %v2102 = vpack.c.bf16 %v2006, %v2005
        %v2103 = vpack.c.bf16 %v2008, %v2007
        %v2104 = vpack.c.bf16 %v2010, %v2009
        %v2105 = vpack.c.bf16 %v2012, %v2011
        %v2110 = vunpack.c.l.b16 %v2102
        %v2111 = vunpack.c.h.b16 %v2102
        %v2112 = vunpack.c.l.b16 %v2103
        %v2113 = vunpack.c.h.b16 %v2103
        %v2114 = vunpack.c.l.b16 %v2104
        %v2115 = vunpack.c.h.b16 %v2104
        %v2116 = vunpack.c.l.b16 %v2105
        %v2117 = vunpack.c.h.b16 %v2105
        %v2118 = vpack.c.b16 %v2110, %v2110
        %v2119 = vpack.c.b16 %v2111, %v2111
        %v2120 = vpack.c.b16 %v2112, %v2112
        %v2121 = vpack.c.b16 %v2113, %v2113
        %v2122 = vpack.c.b16 %v2114, %v2114
        %v2123 = vpack.c.b16 %v2115, %v2115
        %v2124 = vpack.c.b16 %v2116, %v2116
        %v2125 = vpack.c.b16 %v2117, %v2117
        %2134 = vst [vmem:[%s612] sm:$0xf] %v2118
        %2135 = vst [vmem:[%s612 + $0x4] sm:$0xf] %v2119
        %2136 = vst [vmem:[%s612 + $0x8] sm:$0xf] %v2120
        %2137 = vst [vmem:[%s612 + $0xc] sm:$0xf] %v2121
        %2138 = vst [vmem:[%s612 + $0x10] sm:$0xf] %v2122
        %2139 = vst [vmem:[%s612 + $0x14] sm:$0xf] %v2123
        %2140 = vst [vmem:[%s612 + $0x18] sm:$0xf] %v2124
        %2141 = vst [vmem:[%s612 + $0x1c] sm:$0xf] %v2125
        %v2142 = vpack.c.bf16 %v1563, %v1560
        %v2143 = vpack.c.bf16 %v1571, %v1568
        %v2144 = vpack.c.bf16 %v1579, %v1576
        %v2145 = vpack.c.bf16 %v1587, %v1584
        %v2146 = vpack.c.bf16 %v1595, %v1592
        %v2147 = vpack.c.bf16 %v1603, %v1600
        %v2148 = vpack.c.bf16 %v1611, %v1608
        %v2149 = vpack.c.bf16 %v1619, %v1616
        %v2158 = vunpack.c.l.b16 %v2142
        %v2159 = vunpack.c.h.b16 %v2142
        %v2160 = vunpack.c.l.b16 %v2143
        %v2161 = vunpack.c.h.b16 %v2143
        %v2162 = vunpack.c.l.b16 %v2144
        %v2163 = vunpack.c.h.b16 %v2144
        %v2164 = vunpack.c.l.b16 %v2145
        %v2165 = vunpack.c.h.b16 %v2145
        %v2166 = vunpack.c.l.b16 %v2146
        %v2167 = vunpack.c.h.b16 %v2146
        %v2168 = vunpack.c.l.b16 %v2147
        %v2169 = vunpack.c.h.b16 %v2147
        %v2170 = vunpack.c.l.b16 %v2148
        %v2171 = vunpack.c.h.b16 %v2148
        %v2172 = vunpack.c.l.b16 %v2149
        %v2173 = vunpack.c.h.b16 %v2149
        %v2174 = vpack.c.b16 %v2158, %v2158
        %v2175 = vpack.c.b16 %v2159, %v2159
        %v2176 = vpack.c.b16 %v2160, %v2160
        %v2177 = vpack.c.b16 %v2161, %v2161
        %v2178 = vpack.c.b16 %v2162, %v2162
        %v2179 = vpack.c.b16 %v2163, %v2163
        %v2180 = vpack.c.b16 %v2164, %v2164
        %v2181 = vpack.c.b16 %v2165, %v2165
        %v2182 = vpack.c.b16 %v2166, %v2166
        %v2183 = vpack.c.b16 %v2167, %v2167
        %v2184 = vpack.c.b16 %v2168, %v2168
        %v2185 = vpack.c.b16 %v2169, %v2169
        %v2186 = vpack.c.b16 %v2170, %v2170
        %v2187 = vpack.c.b16 %v2171, %v2171
        %v2188 = vpack.c.b16 %v2172, %v2172
        %v2189 = vpack.c.b16 %v2173, %v2173
        %2206 = vst.msk [vmem:[%s619] sm:$0xf] %vm2085, %v2174
        %2207 = vst.msk [vmem:[%s619 + $0x4] sm:$0xf] %vm2085, %v2175
        %2208 = vst.msk [vmem:[%s619 + $0x8] sm:$0xf] %vm2085, %v2176
        %2209 = vst.msk [vmem:[%s619 + $0xc] sm:$0xf] %vm2085, %v2177
        %2210 = vst.msk [vmem:[%s619 + $0x10] sm:$0xf] %vm2085, %v2178
        %2211 = vst.msk [vmem:[%s619 + $0x14] sm:$0xf] %vm2085, %v2179
        %2212 = vst.msk [vmem:[%s619 + $0x18] sm:$0xf] %vm2085, %v2180
        %2213 = vst.msk [vmem:[%s619 + $0x1c] sm:$0xf] %vm2085, %v2181
        %2214 = vst.msk [vmem:[%s619 + $0x20] sm:$0xf] %vm2085, %v2182
        %2215 = vst.msk [vmem:[%s619 + $0x24] sm:$0xf] %vm2085, %v2183
        %2216 = vst.msk [vmem:[%s619 + $0x28] sm:$0xf] %vm2085, %v2184
        %2217 = vst.msk [vmem:[%s619 + $0x2c] sm:$0xf] %vm2085, %v2185
        %2218 = vst.msk [vmem:[%s619 + $0x30] sm:$0xf] %vm2085, %v2186
        %2219 = vst.msk [vmem:[%s619 + $0x34] sm:$0xf] %vm2085, %v2187
        %2220 = vst.msk [vmem:[%s619 + $0x38] sm:$0xf] %vm2085, %v2188
        %2221 = vst.msk [vmem:[%s619 + $0x3c] sm:$0xf] %vm2085, %v2189
        %2222 = vrot.lane.b32.xlu0 %v2053, 64
        %v2223 = vpop.permute.xlu0 %2222
        %2224 = vrot.lane.b32.xlu0 %v2054, 64
        %v2225 = vpop.permute.xlu0 %2224
        %2226 = vrot.lane.b32.xlu0 %v2055, 64
        %v2227 = vpop.permute.xlu0 %2226
        %2228 = vrot.lane.b32.xlu0 %v2056, 64
        %v2229 = vpop.permute.xlu0 %2228
        %2230 = vrot.lane.b32.xlu0 %v2057, 64
        %v2231 = vpop.permute.xlu0 %2230
        %2232 = vrot.lane.b32.xlu0 %v2058, 64
        %v2233 = vpop.permute.xlu0 %2232
        %2234 = vrot.lane.b32.xlu0 %v2059, 64
        %v2235 = vpop.permute.xlu0 %2234
        %2236 = vrot.lane.b32.xlu0 %v2060, 64
        %v2237 = vpop.permute.xlu0 %2236
        %2238 = vrot.lane.b32.xlu0 %v2061, 64
        %v2239 = vpop.permute.xlu0 %2238
        %2240 = vrot.lane.b32.xlu0 %v2062, 64
        %v2241 = vpop.permute.xlu0 %2240
        %2242 = vrot.lane.b32.xlu0 %v2063, 64
        %v2243 = vpop.permute.xlu0 %2242
        %2244 = vrot.lane.b32.xlu0 %v2064, 64
        %v2245 = vpop.permute.xlu0 %2244
        %2246 = vrot.lane.b32.xlu0 %v2065, 64
        %v2247 = vpop.permute.xlu0 %2246
        %2248 = vrot.lane.b32.xlu0 %v2066, 64
        %v2249 = vpop.permute.xlu0 %2248
        %2250 = vrot.lane.b32.xlu0 %v2067, 64
        %v2251 = vpop.permute.xlu0 %2250
        %2252 = vrot.lane.b32.xlu0 %v2068, 64
        %v2253 = vpop.permute.xlu0 %2252
        %s2270 = scalar_lea.vmem %s605, 64 [#allocation17]
        %2271 = vst.msk [vmem:[%s2270] sm:$0xf] %vm2085, %v2223
        %2272 = vst.msk [vmem:[%s2270 + $0x4] sm:$0xf] %vm2085, %v2225
        %2273 = vst.msk [vmem:[%s2270 + $0x8] sm:$0xf] %vm2085, %v2227
        %2274 = vst.msk [vmem:[%s2270 + $0xc] sm:$0xf] %vm2085, %v2229
        %2275 = vst.msk [vmem:[%s2270 + $0x10] sm:$0xf] %vm2085, %v2231
        %2276 = vst.msk [vmem:[%s2270 + $0x14] sm:$0xf] %vm2085, %v2233
        %2277 = vst.msk [vmem:[%s2270 + $0x18] sm:$0xf] %vm2085, %v2235
        %2278 = vst.msk [vmem:[%s2270 + $0x1c] sm:$0xf] %vm2085, %v2237
        %2279 = vst.msk [vmem:[%s2270 + $0x20] sm:$0xf] %vm2085, %v2239
        %2280 = vst.msk [vmem:[%s2270 + $0x24] sm:$0xf] %vm2085, %v2241
        %2281 = vst.msk [vmem:[%s2270 + $0x28] sm:$0xf] %vm2085, %v2243
        %2282 = vst.msk [vmem:[%s2270 + $0x2c] sm:$0xf] %vm2085, %v2245
        %2283 = vst.msk [vmem:[%s2270 + $0x30] sm:$0xf] %vm2085, %v2247
        %2284 = vst.msk [vmem:[%s2270 + $0x34] sm:$0xf] %vm2085, %v2249
        %2285 = vst.msk [vmem:[%s2270 + $0x38] sm:$0xf] %vm2085, %v2251
        %2286 = vst.msk [vmem:[%s2270 + $0x3c] sm:$0xf] %vm2085, %v2253
        %v2287 = vpack.c.bf16 %v2014, %v2013
        %v2288 = vpack.c.bf16 %v2016, %v2015
        %v2289 = vpack.c.bf16 %v2018, %v2017
        %v2290 = vpack.c.bf16 %v2020, %v2019
        %v2295 = vunpack.c.l.b16 %v2287
        %v2296 = vunpack.c.h.b16 %v2287
        %v2297 = vunpack.c.l.b16 %v2288
        %v2298 = vunpack.c.h.b16 %v2288
        %v2299 = vunpack.c.l.b16 %v2289
        %v2300 = vunpack.c.h.b16 %v2289
        %v2301 = vunpack.c.l.b16 %v2290
        %v2302 = vunpack.c.h.b16 %v2290
        %v2303 = vpack.c.b16 %v2295, %v2295
        %v2304 = vpack.c.b16 %v2296, %v2296
        %v2305 = vpack.c.b16 %v2297, %v2297
        %v2306 = vpack.c.b16 %v2298, %v2298
        %v2307 = vpack.c.b16 %v2299, %v2299
        %v2308 = vpack.c.b16 %v2300, %v2300
        %v2309 = vpack.c.b16 %v2301, %v2301
        %v2310 = vpack.c.b16 %v2302, %v2302
        %s2319 = scalar_lea.vmem %s612, 32 [#allocation19]
        %2320 = vst [vmem:[%s2319] sm:$0xf] %v2303
        %2321 = vst [vmem:[%s2319 + $0x4] sm:$0xf] %v2304
        %2322 = vst [vmem:[%s2319 + $0x8] sm:$0xf] %v2305
        %2323 = vst [vmem:[%s2319 + $0xc] sm:$0xf] %v2306
        %2324 = vst [vmem:[%s2319 + $0x10] sm:$0xf] %v2307
        %2325 = vst [vmem:[%s2319 + $0x14] sm:$0xf] %v2308
        %2326 = vst [vmem:[%s2319 + $0x18] sm:$0xf] %v2309
        %2327 = vst [vmem:[%s2319 + $0x1c] sm:$0xf] %v2310
        %2328 = vrot.lane.b32.xlu0 %v2174, 64
        %v2329 = vpop.permute.xlu0 %2328
        %2330 = vrot.lane.b32.xlu0 %v2175, 64
        %v2331 = vpop.permute.xlu0 %2330
        %2332 = vrot.lane.b32.xlu0 %v2176, 64
        %v2333 = vpop.permute.xlu0 %2332
        %2334 = vrot.lane.b32.xlu0 %v2177, 64
        %v2335 = vpop.permute.xlu0 %2334
        %2336 = vrot.lane.b32.xlu0 %v2178, 64
        %v2337 = vpop.permute.xlu0 %2336
        %2338 = vrot.lane.b32.xlu0 %v2179, 64
        %v2339 = vpop.permute.xlu0 %2338
        %2340 = vrot.lane.b32.xlu0 %v2180, 64
        %v2341 = vpop.permute.xlu0 %2340
        %2342 = vrot.lane.b32.xlu0 %v2181, 64
        %v2343 = vpop.permute.xlu0 %2342
        %2344 = vrot.lane.b32.xlu0 %v2182, 64
        %v2345 = vpop.permute.xlu0 %2344
        %2346 = vrot.lane.b32.xlu0 %v2183, 64
        %v2347 = vpop.permute.xlu0 %2346
        %2348 = vrot.lane.b32.xlu0 %v2184, 64
        %v2349 = vpop.permute.xlu0 %2348
        %2350 = vrot.lane.b32.xlu0 %v2185, 64
        %v2351 = vpop.permute.xlu0 %2350
        %2352 = vrot.lane.b32.xlu0 %v2186, 64
        %v2353 = vpop.permute.xlu0 %2352
        %2354 = vrot.lane.b32.xlu0 %v2187, 64
        %v2355 = vpop.permute.xlu0 %2354
        %2356 = vrot.lane.b32.xlu0 %v2188, 64
        %v2357 = vpop.permute.xlu0 %2356
        %2358 = vrot.lane.b32.xlu0 %v2189, 64
        %v2359 = vpop.permute.xlu0 %2358
        %s2376 = scalar_lea.vmem %s619, 64 [#allocation20]
        %2377 = vst.msk [vmem:[%s2376] sm:$0xf] %vm2085, %v2329
        %2378 = vst.msk [vmem:[%s2376 + $0x4] sm:$0xf] %vm2085, %v2331
        %2379 = vst.msk [vmem:[%s2376 + $0x8] sm:$0xf] %vm2085, %v2333
        %2380 = vst.msk [vmem:[%s2376 + $0xc] sm:$0xf] %vm2085, %v2335
        %2381 = vst.msk [vmem:[%s2376 + $0x10] sm:$0xf] %vm2085, %v2337
        %2382 = vst.msk [vmem:[%s2376 + $0x14] sm:$0xf] %vm2085, %v2339
        %2383 = vst.msk [vmem:[%s2376 + $0x18] sm:$0xf] %vm2085, %v2341
        %2384 = vst.msk [vmem:[%s2376 + $0x1c] sm:$0xf] %vm2085, %v2343
        %2385 = vst.msk [vmem:[%s2376 + $0x20] sm:$0xf] %vm2085, %v2345
        %2386 = vst.msk [vmem:[%s2376 + $0x24] sm:$0xf] %vm2085, %v2347
        %2387 = vst.msk [vmem:[%s2376 + $0x28] sm:$0xf] %vm2085, %v2349
        %2388 = vst.msk [vmem:[%s2376 + $0x2c] sm:$0xf] %vm2085, %v2351
        %2389 = vst.msk [vmem:[%s2376 + $0x30] sm:$0xf] %vm2085, %v2353
        %2390 = vst.msk [vmem:[%s2376 + $0x34] sm:$0xf] %vm2085, %v2355
        %2391 = vst.msk [vmem:[%s2376 + $0x38] sm:$0xf] %vm2085, %v2357
        %2392 = vst.msk [vmem:[%s2376 + $0x3c] sm:$0xf] %vm2085, %v2359
        %s2393 = sand.u32 %s253, 1
        %s2394 = scalar_lea.sflag [#allocation4], %s2393
        %s2395 = sand.u32 %s253, 1
        %s2396 = smul.addr %s2395, 6
        %s2397 = scalar_lea.vmem [#allocation16], %s2396
        %s2398 = sand.u32 %s43, 1
        %s2399 = scalar_lea.sflag [#allocation18], %s2398
        %s2400 = sand.u32 %s281, 1
        %s2401 = smul.addr %s2400, 128
        %s2402 = scalar_lea.vmem [#allocation17], %s2401
        %s2403 = sand.u32 %s43, 1
        %s2404 = scalar_lea.sflag [#allocation18], %s2403
        %s2405 = sand.u32 %s309, 1
        %s2406 = smul.addr %s2405, 64
        %s2407 = scalar_lea.vmem [#allocation19], %s2406
        %s2408 = sand.u32 %s337, 1
        %s2409 = scalar_lea.sflag [#allocation21], %s2408
        %s2410 = sand.u32 %s337, 1
        %s2411 = smul.addr %s2410, 128
        %s2412 = scalar_lea.vmem [#allocation20], %s2411
        // Predicated region
        $region89: #{tpu_custom_call.1} parent=51 // pred_check
          %p2413 = pneg %p263
        $region90: #{tpu_custom_call.1} parent=51 // pred_check_branch
          %2415 = sbr.rel (%p2413) target = $region92
        $region91: #{tpu_custom_call.1} parent=51 // pred_region
          %s2417 = ssub.s32 96, 96
          %2418 = vsyncadd %s2394, %s2417
          %s2419 = smul.addr %s47, 6
          %s2420 = smul.addr %s2419, 16
          %s2421 = scalar_lea.hbm %s8, %s2420
          %s2423 = sshll.u32 %s2397, 4
          %s2424 = int_to_ptr.vmem [resolvable:$true] %s2423
          %2426 = dma.vmem_to_hbm [thread:$0]  %s2424, 96, %s2421, %s2394
        $region92: #{tpu_custom_call.1} parent=51 // pred_fallthru
          _
        // Predicated region
        $region93: #{tpu_custom_call.1} parent=51 // pred_check
          %p2427 = pneg %p291
        $region94: #{tpu_custom_call.1} parent=51 // pred_check_branch
          %2429 = sbr.rel (%p2427) target = $region96
        $region95: #{tpu_custom_call.1} parent=51 // pred_region
          #allocation23 [shape = 'u32[6]{0}', space=smem, size = 0x18, scoped, tag = 'DMA stride descriptor']
          %s2430 = smul.u32 16, %s48
          %s2432 = ssub.s32 2048, 2048
          %2433 = vsyncadd %s2399, %s2432
          %s2434 = smul.addr %s47, 64
          %s2435 = sadd.s32 %s2430, %s2434
          %s2436 = smul.addr %s2435, 64
          %s2437 = scalar_lea.hbm %s9, %s2436
          %s2439 = sshll.u32 1, 14
          %s2440 = sxor.u32 4294967295, %s2439
          %s2443 = sshll.u32 7, 18
          %s2444 = sxor.u32 4294967295, %s2443
          %s2445 = sand.u32 0, %s2444
          %s2447 = sor.u32 %s2445, 0
          %s2449 = sshll.u32 3, 24
          %s2450 = sxor.u32 4294967295, %s2449
          %s2451 = sand.u32 %s2447, %s2450
          %s2453 = sor.u32 %s2451, 0
          %s2454 = sshll.u32 %s2402, 4
          %s2455 = int_to_ptr.vmem [resolvable:$true] %s2454
          %2461 = sst [smem:[#allocation23]] 1024
          %s2462 = scalar_lea.smem [#allocation23], 1
          %2463 = sst [smem:[%s2462]] 2048
          %s2464 = scalar_lea.smem [#allocation23], 2
          %2465 = sst [smem:[%s2464]] 16
          %s2466 = scalar_lea.smem [#allocation23], 3
          %2467 = sst [smem:[%s2466]] 64
          %s2468 = scalar_lea.smem [#allocation23], 4
          %2469 = sst [smem:[%s2468]] 64
          %s2470 = scalar_lea.smem [#allocation23], 5
          %2471 = sst [smem:[%s2470]] 4
          %2473 = dma.general %s2455, 2048, %s2437, %s2399, [#allocation22], [#allocation23], %s2453, 0
        $region96: #{tpu_custom_call.1} parent=51 // pred_fallthru
          _
        // Predicated region
        $region97: #{tpu_custom_call.1} parent=51 // pred_check
          %p2474 = pneg %p319
        $region98: #{tpu_custom_call.1} parent=51 // pred_check_branch
          %2476 = sbr.rel (%p2474) target = $region100
        $region99: #{tpu_custom_call.1} parent=51 // pred_region
          %s2478 = ssub.s32 1024, 1024
          %2479 = vsyncadd %s2404, %s2478
          %s2480 = smul.addr %s47, 32
          %s2481 = sadd.s32 %s48, %s2480
          %s2482 = smul.addr %s2481, 64
          %s2483 = scalar_lea.hbm %s10, %s2482
          %s2484 = sshll.u32 %s2407, 4
          %s2485 = int_to_ptr.vmem [resolvable:$true] %s2484
          %2490 = dma.vmem_to_hbm [thread:$0]  %s2485, 1024, %s2483, %s2404, 64, 128, 4
        $region100: #{tpu_custom_call.1} parent=51 // pred_fallthru
          _
        // Predicated region
        $region101: #{tpu_custom_call.1} parent=51 // pred_check
          %p2491 = pneg %p347
        $region102: #{tpu_custom_call.1} parent=51 // pred_check_branch
          %2493 = sbr.rel (%p2491) target = $region104
        $region103: #{tpu_custom_call.1} parent=51 // pred_region
          #allocation25 [shape = 'u32[6]{0}', space=smem, size = 0x18, scoped, tag = 'DMA stride descriptor']
          %s2494 = smul.u32 16, %s48
          %s2496 = ssub.s32 2048, 2048
          %2497 = vsyncadd %s2409, %s2496
          %s2498 = smul.addr %s47, 64
          %s2499 = sadd.s32 %s2494, %s2498
          %s2500 = smul.addr %s2499, 64
          %s2501 = scalar_lea.hbm %s11, %s2500
          %s2503 = sshll.u32 1, 14
          %s2504 = sxor.u32 4294967295, %s2503
          %s2507 = sshll.u32 7, 18
          %s2508 = sxor.u32 4294967295, %s2507
          %s2509 = sand.u32 0, %s2508
          %s2511 = sor.u32 %s2509, 0
          %s2513 = sshll.u32 3, 24
          %s2514 = sxor.u32 4294967295, %s2513
          %s2515 = sand.u32 %s2511, %s2514
          %s2517 = sor.u32 %s2515, 0
          %s2518 = sshll.u32 %s2412, 4
          %s2519 = int_to_ptr.vmem [resolvable:$true] %s2518
          %2525 = sst [smem:[#allocation25]] 1024
          %s2526 = scalar_lea.smem [#allocation25], 1
          %2527 = sst [smem:[%s2526]] 2048
          %s2528 = scalar_lea.smem [#allocation25], 2
          %2529 = sst [smem:[%s2528]] 16
          %s2530 = scalar_lea.smem [#allocation25], 3
          %2531 = sst [smem:[%s2530]] 64
          %s2532 = scalar_lea.smem [#allocation25], 4
          %2533 = sst [smem:[%s2532]] 64
          %s2534 = scalar_lea.smem [#allocation25], 5
          %2535 = sst [smem:[%s2534]] 4
          %2537 = dma.general %s2519, 2048, %s2501, %s2409, [#allocation24], [#allocation25], %s2517, 0
        $region104: #{tpu_custom_call.1} parent=51 // pred_fallthru
          _
      $region52: #{tpu_custom_call.1} parent=5 // pred_fallthru
        _
      %p2538 = scmp.le.s32.totalorder 2, %s38
      // Predicated region
      $region105: #{tpu_custom_call.1} parent=5 // pred_check
        %p2539 = pneg %p2538
      $region106: #{tpu_custom_call.1} parent=5 // pred_check_branch
        %2541 = sbr.rel (%p2539) target = $region108
      $region107: #{tpu_custom_call.1} parent=5 // pred_region
        %s2542 = ssub.s32 %s38, 2
        // Predicated region
        $region109: #{tpu_custom_call.1} parent=107 // pred_check
          %p2543 = pneg %p269
        $region110: #{tpu_custom_call.1} parent=107 // pred_check_branch
          %2545 = sbr.rel (%p2543) target = $region112
        $region111: #{tpu_custom_call.1} parent=107 // pred_region
          %s2546 = sand.u32 %s254, 1
          %s2547 = scalar_lea.sflag [#allocation4], %s2546
          %s2548 = sand.u32 %s254, 1
          %s2549 = smul.addr %s2548, 6
          %s2550 = scalar_lea.vmem [#allocation16], %s2549
          %2551 = dma.done %s2547, 96
        $region112: #{tpu_custom_call.1} parent=107 // pred_fallthru
          _
        // Predicated region
        $region113: #{tpu_custom_call.1} parent=107 // pred_check
          %p2552 = pneg %p297
        $region114: #{tpu_custom_call.1} parent=107 // pred_check_branch
          %2554 = sbr.rel (%p2552) target = $region116
        $region115: #{tpu_custom_call.1} parent=107 // pred_region
          %s2555 = sand.u32 %s44, 1
          %s2556 = scalar_lea.sflag [#allocation18], %s2555
          %s2557 = sand.u32 %s282, 1
          %s2558 = smul.addr %s2557, 128
          %s2559 = scalar_lea.vmem [#allocation17], %s2558
          %2560 = dma.done %s2556, 2048
        $region116: #{tpu_custom_call.1} parent=107 // pred_fallthru
          _
        // Predicated region
        $region117: #{tpu_custom_call.1} parent=107 // pred_check
          %p2561 = pneg %p325
        $region118: #{tpu_custom_call.1} parent=107 // pred_check_branch
          %2563 = sbr.rel (%p2561) target = $region120
        $region119: #{tpu_custom_call.1} parent=107 // pred_region
          %s2564 = sand.u32 %s44, 1
          %s2565 = scalar_lea.sflag [#allocation18], %s2564
          %s2566 = sand.u32 %s310, 1
          %s2567 = smul.addr %s2566, 64
          %s2568 = scalar_lea.vmem [#allocation19], %s2567
          %2569 = dma.done %s2565, 1024
        $region120: #{tpu_custom_call.1} parent=107 // pred_fallthru
          _
        // Predicated region
        $region121: #{tpu_custom_call.1} parent=107 // pred_check
          %p2570 = pneg %p353
        $region122: #{tpu_custom_call.1} parent=107 // pred_check_branch
          %2572 = sbr.rel (%p2570) target = $region124
        $region123: #{tpu_custom_call.1} parent=107 // pred_region
          %s2573 = sand.u32 %s338, 1
          %s2574 = scalar_lea.sflag [#allocation21], %s2573
          %s2575 = sand.u32 %s338, 1
          %s2576 = smul.addr %s2575, 128
          %s2577 = scalar_lea.vmem [#allocation20], %s2576
          %2578 = dma.done %s2574, 2048
        $region124: #{tpu_custom_call.1} parent=107 // pred_fallthru
          _
      $region108: #{tpu_custom_call.1} parent=5 // pred_fallthru
        _
    $region6: #{tpu_custom_call.1} parent=1 // loop_footer
      %s42 = sadd.s32 1, %s38
    $region7: #{tpu_custom_call.1} parent=1 // loop_footer_branch
      %37 = sbr.rel target = $region3
    $region8: #{tpu_custom_call.1} parent=1 // loop_exit
      _
    %2579 = vsyncpa [#allocation3], 1
    %s2580 = scalar_lea.sflag [#allocation3], 1
    %2581 = vsyncpa %s2580, 1
    %2582 = vsyncpa [#allocation6], 1
    %s2583 = scalar_lea.sflag [#allocation6], 1
    %2584 = vsyncpa %s2583, 1
    %2585 = vsyncpa [#allocation9], 1
    %s2586 = scalar_lea.sflag [#allocation9], 1
    %2587 = vsyncpa %s2586, 1
    %2588 = vsyncpa [#allocation12], 1
    %2589 = vsyncpa [#allocation15], 1
    %2590 = vsyncpa [#allocation4], 1
    %s2591 = scalar_lea.sflag [#allocation4], 1
    %2592 = vsyncpa %s2591, 1
    %2593 = vsyncpa [#allocation18], 1
    %s2594 = scalar_lea.sflag [#allocation18], 1
    %2595 = vsyncpa %s2594, 1
    %2596 = vsyncpa [#allocation21], 1
    %s2597 = scalar_lea.sflag [#allocation21], 1
    %2598 = vsyncpa %s2597, 1

</llo_original>
